<compile_context>
chip_gen: v5e
topology: v5e:2x2
jax: 0.10.0
libtpu: 0.0.40
codegen_flags: <defaults>
</compile_context>

<pallas_src>
import jax
import jax.numpy as jnp
from jax.experimental import pallas as pl
from jax.experimental.pallas import tpu as pltpu

OUTPUT_EMB_SIZE = 512


def _round_up(x, m):
    return ((x + m - 1) // m) * m


def clap_audio_kernel(pm_ref, wp_ref, bp_ref, g_ref, bta_ref,
                      w1_ref, b1_ref, w2_ref, b2_ref, o_ref):
    # pm_ref block: (TM, patch_dim) bf16 — per-audio mean over patches (pooling
    # hoisted ahead of the linear patch embed; exact algebraic rewrite for the
    # linear surrogate encoder). Already bf16 -> feeds the MXU directly.
    pm = pm_ref[...]

    # ---- patch embedding on the pooled patch vector (bf16 MXU, f32 acc) ----
    h = jnp.dot(pm, wp_ref[...],
                preferred_element_type=jnp.float32) + bp_ref[...]        # (TM, H) f32

    # ---- LayerNorm over hidden (true width, lane-aligned) ----
    mu = jnp.mean(h, axis=-1, keepdims=True)
    var = jnp.mean((h - mu) ** 2, axis=-1, keepdims=True)
    x = (h - mu) * jax.lax.rsqrt(var + 1e-5)
    x = x * g_ref[...] + bta_ref[...]                                    # (TM, H) f32

    # ---- ClapProjectionLayer: Linear -> ReLU -> Linear (bf16 MXU, f32 acc) ----
    h1 = jnp.dot(x.astype(jnp.bfloat16), w1_ref[...],
                 preferred_element_type=jnp.float32) + b1_ref[...]       # (TM, 512)
    h1 = jnp.maximum(h1, 0.0)
    out = jnp.dot(h1.astype(jnp.bfloat16), w2_ref[...],
                  preferred_element_type=jnp.float32) + b2_ref[...]      # (TM, 512)

    # ---- F.normalize(dim=-1): x / max(||x||, 1e-12) ----
    ss = jnp.sum(out * out, axis=-1, keepdims=True)
    inv = jax.lax.rsqrt(jnp.maximum(ss, 1e-24))   # == 1 / max(||x||, 1e-12)
    o_ref[...] = (out * inv).astype(o_ref.dtype)


def choose_tm(n):
    """Row tile: fill the MXU (cap 256 rows) but keep >= 2 parallel grid blocks
    for v7x's two TensorCores when N allows it; multiples of 16 (bf16 sublanes)."""
    n16 = _round_up(max(n, 1), 16)
    return int(min(256, max(16, _round_up(pl.cdiv(n16, 2), 16))))


def clap_audio_forward(pooled_patches, params, *, tm=None):
    """pooled_patches: (N, patch_dim) — per-audio mean over patches.
    Returns (N, 512) f32, L2-normalized."""
    n, d = pooled_patches.shape
    hidden = params["wp"].shape[1]
    if tm is None:
        tm = choose_tm(n)

    # Pad the audio axis up to a multiple of the row tile; stream rows in bf16
    # (same cast that would happen at the dot, just done once in the wrapper).
    n_pad = _round_up(n, tm)
    pm = jnp.pad(pooled_patches.astype(jnp.bfloat16), ((0, n_pad - n), (0, 0)))

    const2d = lambda shape: pl.BlockSpec(shape, lambda i: (0, 0))

    grid_spec = pltpu.PrefetchScalarGridSpec(
        num_scalar_prefetch=0,
        grid=(n_pad // tm,),
        in_specs=[
            pl.BlockSpec((tm, d), lambda i: (i, 0)),        # pooled patches (streamed, bf16)
            const2d((d, hidden)),                           # wp (bf16, VMEM-resident)
            const2d((1, hidden)),                           # bp
            const2d((1, hidden)),                           # ln gamma
            const2d((1, hidden)),                           # ln beta
            const2d((hidden, OUTPUT_EMB_SIZE)),             # w1 (bf16)
            const2d((1, OUTPUT_EMB_SIZE)),                  # b1
            const2d((OUTPUT_EMB_SIZE, OUTPUT_EMB_SIZE)),    # w2 (bf16)
            const2d((1, OUTPUT_EMB_SIZE)),                  # b2
        ],
        out_specs=pl.BlockSpec((tm, OUTPUT_EMB_SIZE), lambda i: (i, 0)),
    )

    embs = pl.pallas_call(
        clap_audio_kernel,
        out_shape=jax.ShapeDtypeStruct((n_pad, OUTPUT_EMB_SIZE), jnp.float32),
        grid_spec=grid_spec,
        compiler_params=pltpu.CompilerParams(
            dimension_semantics=("parallel",)),
    )(pm, params["wp"], params["bp"], params["gamma"], params["beta"],
      params["w1"], params["b1"], params["w2"], params["b2"])
    return embs[:n]


def block_mean_patches(input_features, patch_f, patch_t):
    """NCHW (N,1,F,T) -> (N, patch_f*patch_t): mean over all patches, computed
    directly (no im2col intermediate / transpose)."""
    n, c, f, t = input_features.shape
    assert c == 1 and f % patch_f == 0 and t % patch_t == 0
    x = input_features.reshape(n, f // patch_f, patch_f, t // patch_t, patch_t)
    return jnp.mean(x, axis=(1, 3)).reshape(n, patch_f * patch_t)


def init_params(key, patch_dim, hidden):
    ks = jax.random.split(key, 5)
    s = lambda d: 1.0 / jnp.sqrt(jnp.float32(d))
    return {
        "wp": (jax.random.normal(ks[0], (patch_dim, hidden), jnp.float32)
               * s(patch_dim)).astype(jnp.bfloat16),
        "bp": jnp.zeros((1, hidden), jnp.float32),
        "gamma": jnp.ones((1, hidden), jnp.float32),
        "beta": jnp.zeros((1, hidden), jnp.float32),
        "w1": (jax.random.normal(ks[1], (hidden, OUTPUT_EMB_SIZE), jnp.float32)
               * s(hidden)).astype(jnp.bfloat16),
        "b1": jax.random.normal(ks[2], (1, OUTPUT_EMB_SIZE), jnp.float32) * 0.01,
        "w2": (jax.random.normal(ks[3], (OUTPUT_EMB_SIZE, OUTPUT_EMB_SIZE), jnp.float32)
               * s(OUTPUT_EMB_SIZE)).astype(jnp.bfloat16),
        "b2": jax.random.normal(ks[4], (1, OUTPUT_EMB_SIZE), jnp.float32) * 0.01,
    }


if __name__ == "__main__":
    key = jax.random.PRNGKey(0)
    k_in, k_par = jax.random.split(key)

    # Small synthetic shapes: 32 audios, mel-spectrogram (1, n_mels=16, n_frames=64).
    # hidden = 128 (lane-aligned); patch_dim = 16 (no K padding needed).
    n_audios, n_mels, n_frames = 32, 16, 64
    patch_f = patch_t = 4
    hidden = 128

    # Each list element of `audios` -> input_features (1, 1, n_mels, n_frames); stacked.
    input_features = jax.random.normal(
        k_in, (n_audios, 1, n_mels, n_frames), jnp.float32)   # cast to float32 as in torch

    params = init_params(k_par, patch_f * patch_t, hidden)

    # Pooling hoisted ahead of the patch-embed matmul (mean commutes with Linear).
    pooled = block_mean_patches(input_features, patch_f, patch_t)   # (N, 16) f32

    embs = clap_audio_forward(pooled, params)                       # (N, 512), L2-normalized
    # adaptive tm=16 here -> grid=(2,) parallel blocks; scales to tm=256 for large N

    # torch.stack(embs).view(-1, 1, OUTPUT_EMB_SIZE)
    out = embs.reshape(-1, 1, OUTPUT_EMB_SIZE)
    jax.block_until_ready(out)

    assert out.shape == (n_audios, 1, OUTPUT_EMB_SIZE)
    assert out.dtype == jnp.float32
    # sanity: rows are unit-norm
    norms = jnp.linalg.norm(out[:, 0, :], axis=-1)
    assert bool(jnp.all(jnp.abs(norms - 1.0) < 1e-3))
    print("KERNEL_OK")
</pallas_src>

<mosaic_0001>
module attributes {stable_mosaic.version = 11 : i64} {
  func.func @clap_audio_kernel(%arg0: i32, %arg1: memref<16x16xbf16, #tpu.memory_space<vmem>>, %arg2: memref<16x128xbf16, #tpu.memory_space<vmem>>, %arg3: memref<1x128xf32, #tpu.memory_space<vmem>>, %arg4: memref<1x128xf32, #tpu.memory_space<vmem>>, %arg5: memref<1x128xf32, #tpu.memory_space<vmem>>, %arg6: memref<128x512xbf16, #tpu.memory_space<vmem>>, %arg7: memref<1x512xf32, #tpu.memory_space<vmem>>, %arg8: memref<512x512xbf16, #tpu.memory_space<vmem>>, %arg9: memref<1x512xf32, #tpu.memory_space<vmem>>, %arg10: memref<16x512xf32, #tpu.memory_space<vmem>>) attributes {dimension_semantics = [#tpu.dimension_semantics<parallel>], iteration_bounds = array<i64: 2>, scalar_prefetch = 0 : i64, scratch_operands = 0 : i64, tpu.core_type = #tpu.core_type<tc>, window_params = [{transform_indices = @transform_0, window_bounds = array<i64: 16, 16>}, {pipeline_mode = #tpu.pipeline_mode<synchronous>, transform_indices = @transform_1, window_bounds = array<i64: 16, 128>}, {pipeline_mode = #tpu.pipeline_mode<synchronous>, transform_indices = @transform_2, window_bounds = array<i64: 1, 128>}, {pipeline_mode = #tpu.pipeline_mode<synchronous>, transform_indices = @transform_3, window_bounds = array<i64: 1, 128>}, {pipeline_mode = #tpu.pipeline_mode<synchronous>, transform_indices = @transform_4, window_bounds = array<i64: 1, 128>}, {pipeline_mode = #tpu.pipeline_mode<synchronous>, transform_indices = @transform_5, window_bounds = array<i64: 128, 512>}, {pipeline_mode = #tpu.pipeline_mode<synchronous>, transform_indices = @transform_6, window_bounds = array<i64: 1, 512>}, {pipeline_mode = #tpu.pipeline_mode<synchronous>, transform_indices = @transform_7, window_bounds = array<i64: 512, 512>}, {pipeline_mode = #tpu.pipeline_mode<synchronous>, transform_indices = @transform_8, window_bounds = array<i64: 1, 512>}, {transform_indices = @transform_9, window_bounds = array<i64: 16, 512>}]} {
    %c0 = arith.constant 0 : index
    %c0_0 = arith.constant 0 : index
    %0 = vector.load %arg1[%c0, %c0_0] : memref<16x16xbf16, #tpu.memory_space<vmem>>, vector<16x16xbf16>
    %c0_1 = arith.constant 0 : index
    %c0_2 = arith.constant 0 : index
    %1 = vector.load %arg2[%c0_1, %c0_2] : memref<16x128xbf16, #tpu.memory_space<vmem>>, vector<16x128xbf16>
    %cst = arith.constant dense<0.000000e+00> : vector<16x128xf32>
    %2 = tpu.matmul %0, %1, %cst {dimension_numbers = #tpu.dot_dimension_numbers<[1], [0], [0], [1], [0, 0, 1, 1], [], []>} : vector<16x16xbf16>, vector<16x128xbf16>, vector<16x128xf32> -> vector<16x128xf32>
    %c0_3 = arith.constant 0 : index
    %c0_4 = arith.constant 0 : index
    %3 = vector.load %arg3[%c0_3, %c0_4] : memref<1x128xf32, #tpu.memory_space<vmem>>, vector<1x128xf32>
    %4 = vector.broadcast %3 : vector<1x128xf32> to vector<16x128xf32>
    %5 = arith.addf %2, %4 : vector<16x128xf32>
    %cst_5 = arith.constant dense<0.000000e+00> : vector<16xf32>
    %6 = vector.multi_reduction <add>, %5, %cst_5 [1] : vector<16x128xf32> to vector<16xf32>
    %7 = vector.shape_cast %6 : vector<16xf32> to vector<16x1xf32>
    %cst_6 = arith.constant 1.280000e+02 : f32
    %8 = vector.broadcast %cst_6 : f32 to vector<16x1xf32>
    %9 = arith.divf %7, %8 : vector<16x1xf32>
    %10 = vector.broadcast %9 : vector<16x1xf32> to vector<16x128xf32>
    %11 = arith.subf %5, %10 : vector<16x128xf32>
    %12 = arith.mulf %11, %11 : vector<16x128xf32>
    %cst_7 = arith.constant dense<0.000000e+00> : vector<16xf32>
    %13 = vector.multi_reduction <add>, %12, %cst_7 [1] : vector<16x128xf32> to vector<16xf32>
    %14 = vector.shape_cast %13 : vector<16xf32> to vector<16x1xf32>
    %cst_8 = arith.constant 1.280000e+02 : f32
    %15 = vector.broadcast %cst_8 : f32 to vector<16x1xf32>
    %16 = arith.divf %14, %15 : vector<16x1xf32>
    %17 = vector.broadcast %9 : vector<16x1xf32> to vector<16x128xf32>
    %18 = arith.subf %5, %17 : vector<16x128xf32>
    %cst_9 = arith.constant 9.99999974E-6 : f32
    %19 = vector.broadcast %cst_9 : f32 to vector<16x1xf32>
    %20 = arith.addf %16, %19 : vector<16x1xf32>
    %21 = math.rsqrt %20 : vector<16x1xf32>
    %22 = vector.broadcast %21 : vector<16x1xf32> to vector<16x128xf32>
    %23 = arith.mulf %18, %22 : vector<16x128xf32>
    %c0_10 = arith.constant 0 : index
    %c0_11 = arith.constant 0 : index
    %24 = vector.load %arg4[%c0_10, %c0_11] : memref<1x128xf32, #tpu.memory_space<vmem>>, vector<1x128xf32>
    %25 = vector.broadcast %24 : vector<1x128xf32> to vector<16x128xf32>
    %26 = arith.mulf %23, %25 : vector<16x128xf32>
    %c0_12 = arith.constant 0 : index
    %c0_13 = arith.constant 0 : index
    %27 = vector.load %arg5[%c0_12, %c0_13] : memref<1x128xf32, #tpu.memory_space<vmem>>, vector<1x128xf32>
    %28 = vector.broadcast %27 : vector<1x128xf32> to vector<16x128xf32>
    %29 = arith.addf %26, %28 : vector<16x128xf32>
    %30 = arith.truncf %29 : vector<16x128xf32> to vector<16x128xbf16>
    %c0_14 = arith.constant 0 : index
    %c0_15 = arith.constant 0 : index
    %31 = vector.load %arg6[%c0_14, %c0_15] : memref<128x512xbf16, #tpu.memory_space<vmem>>, vector<128x512xbf16>
    %cst_16 = arith.constant dense<0.000000e+00> : vector<16x512xf32>
    %32 = tpu.matmul %30, %31, %cst_16 {dimension_numbers = #tpu.dot_dimension_numbers<[1], [0], [0], [1], [0, 0, 1, 1], [], []>} : vector<16x128xbf16>, vector<128x512xbf16>, vector<16x512xf32> -> vector<16x512xf32>
    %c0_17 = arith.constant 0 : index
    %c0_18 = arith.constant 0 : index
    %33 = vector.load %arg7[%c0_17, %c0_18] : memref<1x512xf32, #tpu.memory_space<vmem>>, vector<1x512xf32>
    %34 = vector.broadcast %33 : vector<1x512xf32> to vector<16x512xf32>
    %35 = arith.addf %32, %34 : vector<16x512xf32>
    %cst_19 = arith.constant 0.000000e+00 : f32
    %36 = vector.broadcast %cst_19 : f32 to vector<16x512xf32>
    %37 = arith.maximumf %35, %36 : vector<16x512xf32>
    %38 = arith.truncf %37 : vector<16x512xf32> to vector<16x512xbf16>
    %c0_20 = arith.constant 0 : index
    %c0_21 = arith.constant 0 : index
    %39 = vector.load %arg8[%c0_20, %c0_21] : memref<512x512xbf16, #tpu.memory_space<vmem>>, vector<512x512xbf16>
    %cst_22 = arith.constant dense<0.000000e+00> : vector<16x512xf32>
    %40 = tpu.matmul %38, %39, %cst_22 {dimension_numbers = #tpu.dot_dimension_numbers<[1], [0], [0], [1], [0, 0, 1, 1], [], []>} : vector<16x512xbf16>, vector<512x512xbf16>, vector<16x512xf32> -> vector<16x512xf32>
    %c0_23 = arith.constant 0 : index
    %c0_24 = arith.constant 0 : index
    %41 = vector.load %arg9[%c0_23, %c0_24] : memref<1x512xf32, #tpu.memory_space<vmem>>, vector<1x512xf32>
    %42 = vector.broadcast %41 : vector<1x512xf32> to vector<16x512xf32>
    %43 = arith.addf %40, %42 : vector<16x512xf32>
    %44 = arith.mulf %43, %43 : vector<16x512xf32>
    %cst_25 = arith.constant dense<0.000000e+00> : vector<16xf32>
    %45 = vector.multi_reduction <add>, %44, %cst_25 [1] : vector<16x512xf32> to vector<16xf32>
    %46 = vector.shape_cast %45 : vector<16xf32> to vector<16x1xf32>
    %cst_26 = arith.constant 1.000000e-24 : f32
    %47 = vector.broadcast %cst_26 : f32 to vector<16x1xf32>
    %48 = arith.maximumf %46, %47 : vector<16x1xf32>
    %49 = math.rsqrt %48 : vector<16x1xf32>
    %50 = vector.broadcast %49 : vector<16x1xf32> to vector<16x512xf32>
    %51 = arith.mulf %43, %50 : vector<16x512xf32>
    %c0_27 = arith.constant 0 : index
    %c0_28 = arith.constant 0 : index
    %52 = vector.load %arg10[%c0_27, %c0_28] : memref<16x512xf32, #tpu.memory_space<vmem>>, vector<16x512xf32>
    tpu.vector_store %arg10[%c0_27, %c0_28], %51 {strides = array<i32>} : memref<16x512xf32, #tpu.memory_space<vmem>>, vector<16x512xf32>,
    return
  }
  func.func @transform_0(%arg0: i32) -> (i32, i32) {
    %c0_i32 = arith.constant 0 : i32
    %c0_i32_0 = arith.constant 0 : i32
    return %arg0, %c0_i32 : i32, i32
  }
  func.func @transform_1(%arg0: i32) -> (i32, i32) {
    %c0_i32 = arith.constant 0 : i32
    %c0_i32_0 = arith.constant 0 : i32
    %c0_i32_1 = arith.constant 0 : i32
    return %c0_i32, %c0_i32_0 : i32, i32
  }
  func.func @transform_2(%arg0: i32) -> (i32, i32) {
    %c0_i32 = arith.constant 0 : i32
    %c0_i32_0 = arith.constant 0 : i32
    %c0_i32_1 = arith.constant 0 : i32
    return %c0_i32, %c0_i32_0 : i32, i32
  }
  func.func @transform_3(%arg0: i32) -> (i32, i32) {
    %c0_i32 = arith.constant 0 : i32
    %c0_i32_0 = arith.constant 0 : i32
    %c0_i32_1 = arith.constant 0 : i32
    return %c0_i32, %c0_i32_0 : i32, i32
  }
  func.func @transform_4(%arg0: i32) -> (i32, i32) {
    %c0_i32 = arith.constant 0 : i32
    %c0_i32_0 = arith.constant 0 : i32
    %c0_i32_1 = arith.constant 0 : i32
    return %c0_i32, %c0_i32_0 : i32, i32
  }
  func.func @transform_5(%arg0: i32) -> (i32, i32) {
    %c0_i32 = arith.constant 0 : i32
    %c0_i32_0 = arith.constant 0 : i32
    %c0_i32_1 = arith.constant 0 : i32
    return %c0_i32, %c0_i32_0 : i32, i32
  }
  func.func @transform_6(%arg0: i32) -> (i32, i32) {
    %c0_i32 = arith.constant 0 : i32
    %c0_i32_0 = arith.constant 0 : i32
    %c0_i32_1 = arith.constant 0 : i32
    return %c0_i32, %c0_i32_0 : i32, i32
  }
  func.func @transform_7(%arg0: i32) -> (i32, i32) {
    %c0_i32 = arith.constant 0 : i32
    %c0_i32_0 = arith.constant 0 : i32
    %c0_i32_1 = arith.constant 0 : i32
    return %c0_i32, %c0_i32_0 : i32, i32
  }
  func.func @transform_8(%arg0: i32) -> (i32, i32) {
    %c0_i32 = arith.constant 0 : i32
    %c0_i32_0 = arith.constant 0 : i32
    %c0_i32_1 = arith.constant 0 : i32
    return %c0_i32, %c0_i32_0 : i32, i32
  }
  func.func @transform_9(%arg0: i32) -> (i32, i32) {
    %c0_i32 = arith.constant 0 : i32
    %c0_i32_0 = arith.constant 0 : i32
    return %arg0, %c0_i32 : i32, i32
  }
}

</mosaic_0001>

<llo_original>
// kernel: tpu_custom_call.1
$region0: #{tpu_custom_call.1}
  #allocation0 [shape = 'u32[]', space=smem, size = 0x4, offset = 0x4, fixed_abs, tag = 'smem constant byte address 0x4 - core index']
  #allocation1 [shape = 'u32[72,128]{1,0:T(1,128)}', space=vmem, size = 0x9000, scoped, tag = 'internal scratch']
  %s0 = inlined_call_operand.vmem [shape: bf16[32,16], index: 0, kind: input, shape index: {}]
  %s1 = inlined_call_operand.vmem [shape: bf16[16,128], index: 1, kind: input, shape index: {}]
  %s2 = inlined_call_operand.vmem [shape: f32[1,128], index: 2, kind: input, shape index: {}]
  %s3 = inlined_call_operand.vmem [shape: f32[1,128], index: 3, kind: input, shape index: {}]
  %s4 = inlined_call_operand.vmem [shape: f32[1,128], index: 4, kind: input, shape index: {}]
  %s5 = inlined_call_operand.hbm [shape: bf16[128,512], index: 5, kind: input, shape index: {}]
  %s6 = inlined_call_operand.vmem [shape: f32[1,512], index: 6, kind: input, shape index: {}]
  %s7 = inlined_call_operand.hbm [shape: bf16[512,512], index: 7, kind: input, shape index: {}]
  %s8 = inlined_call_operand.vmem [shape: f32[1,512], index: 8, kind: input, shape index: {}]
  %s9 = inlined_call_operand.hbm [shape: f32[32,512], index: 9, kind: output, shape index: {}]
  %s10 = sld [smem:[#allocation0]]
  $region77: #{tpu_custom_call.1} parent=0
    _
  %s12 = ssub.s32 1, %s10
  %s13 = scalar_select 0, %s12, %s10
  $region1: #{tpu_custom_call.1} parent=0
    #allocation2 [shape = 'u8[131072]{0}', space=vmem, size = 0x20000, scoped, tag = 'input window, operand 5, single buffered']
    #allocation3 [shape = 's32[2]{0}', space=sflag, size = 0x8, scoped, tag = 'scoped memory for tpu_custom_call.1']
    #allocation4 [shape = 's32[2]{0}', space=sflag, size = 0x8, scoped, tag = 'scoped memory for tpu_custom_call.1']
    #allocation5 [shape = 'u8[524288]{0}', space=vmem, size = 0x80000, scoped, tag = 'input window, operand 7, single buffered']
    #allocation6 [shape = 's32[1]{0}', space=sflag, size = 0x4, scoped, tag = 'scoped memory for tpu_custom_call.1']
    #allocation7 [shape = 'u8[65536]{0}', space=vmem, size = 0x10000, scoped, tag = 'output window, operand 0']
    %14 = vsyncpa [#allocation3], 0
    %15 = vsyncpa [#allocation6], 0
    %16 = vsyncpa [#allocation4], 0
    %s17 = scalar_lea.sflag [#allocation4], 1
    %18 = vsyncpa %s17, 0
    loop: start=0, step=1, limit=4
    $region2: #{tpu_custom_call.1} parent=1 // loop_pre_header
      _
    $region3: #{tpu_custom_call.1} parent=1 // loop_header
      %s20 = sphi 0, %s24
      %p21 = scmp.ge.s32.totalorder %s20, 4
      %s30 = sphi 0, %s32
      %s33 = sphi 0, %s30
      %s34 = sphi 0, %s33
      %s50 = sphi 0, %s34
      %s54 = sphi 0, %s54
      %s56 = sphi 0, %s54
      %s57 = sphi 0, %s56
      %s71 = sphi 0, %s57
      %s75 = sphi 0, %s75
      %s77 = sphi 0, %s75
      %s78 = sphi 0, %s77
      %s92 = sphi 0, %s78
      %s96 = sphi 0, %s96
      %s98 = sphi 0, %s96
      %s99 = sphi 0, %s98
      %s113 = sphi 0, %s99
      %s117 = sphi 0, %s117
      %s119 = sphi 0, %s117
      %s120 = sphi 0, %s119
      %s134 = sphi 0, %s120
      %s138 = sphi 0, %s138
      %s140 = sphi 0, %s138
      %s141 = sphi 0, %s140
      %s155 = sphi 0, %s141
      %s159 = sphi 0, %s159
      %s161 = sphi 0, %s159
      %s162 = sphi 0, %s161
      %s176 = sphi 0, %s162
      %s180 = sphi 0, %s180
      %s182 = sphi 0, %s180
      %s183 = sphi 0, %s182
      %s197 = sphi 0, %s183
      %s201 = sphi 0, %s201
      %s203 = sphi 0, %s201
      %s204 = sphi 0, %s203
      %s218 = sphi 0, %s204
      %s224 = sphi 0, %s226
      %s227 = sphi 0, %s224
      %s228 = sphi 0, %s227
      %s244 = sphi 0, %s228
    $region4: #{tpu_custom_call.1} parent=1 // loop_header_branch
      %23 = sbr.rel (%p21) target = $region8
    $region5: #{tpu_custom_call.1} parent=1 // loop_body
      %s25 = ssub.s32 %s20, 1
      %s26 = ssub.s32 %s20, 2
      %s27 = sadd.s32 %s20, 1
      %s28 = ssub.s32 %s20, %s27
      %p29 = scmp.eq.s32.totalorder %s28, 0
      %s31 = sadd.s32 %s30, 1
      %s32 = scalar_select %p29, %s30, %s31
      %p35 = pneg %p29
      %p36 = scmp.eq.s32.totalorder %s20, 1
      %p37 = por %p35, %p36
      %p38 = scmp.ne.s32.totalorder %s30, %s33
      %p39 = scmp.eq.s32.totalorder %s20, 0
      %p40 = por %p38, %p39
      %p41 = scmp.ne.s32.totalorder %s30, %s33
      %p42 = scmp.eq.s32.totalorder %s25, 1
      %p43 = por %p41, %p42
      %p44 = scmp.ne.s32.totalorder %s33, %s34
      %p45 = scmp.eq.s32.totalorder %s25, 0
      %p46 = por %p44, %p45
      %p47 = scmp.ne.s32.totalorder %s33, %s34
      %p48 = scmp.eq.s32.totalorder %s26, 1
      %p49 = por %p47, %p48
      %p51 = scmp.ne.s32.totalorder %s34, %s50
      %p52 = scmp.eq.s32.totalorder %s26, 0
      %p53 = por %p51, %p52
      %s55 = sadd.s32 %s54, 1
      %p58 = scmp.eq.s32.totalorder %s20, 1
      %p59 = scmp.ne.s32.totalorder %s54, %s56
      %p60 = scmp.eq.s32.totalorder %s20, 0
      %p61 = por %p59, %p60
      %p62 = scmp.ne.s32.totalorder %s54, %s56
      %p63 = scmp.eq.s32.totalorder %s25, 1
      %p64 = por %p62, %p63
      %p65 = scmp.ne.s32.totalorder %s56, %s57
      %p66 = scmp.eq.s32.totalorder %s25, 0
      %p67 = por %p65, %p66
      %p68 = scmp.ne.s32.totalorder %s56, %s57
      %p69 = scmp.eq.s32.totalorder %s26, 1
      %p70 = por %p68, %p69
      %p72 = scmp.ne.s32.totalorder %s57, %s71
      %p73 = scmp.eq.s32.totalorder %s26, 0
      %p74 = por %p72, %p73
      %s76 = sadd.s32 %s75, 1
      %p79 = scmp.eq.s32.totalorder %s20, 1
      %p80 = scmp.ne.s32.totalorder %s75, %s77
      %p81 = scmp.eq.s32.totalorder %s20, 0
      %p82 = por %p80, %p81
      %p83 = scmp.ne.s32.totalorder %s75, %s77
      %p84 = scmp.eq.s32.totalorder %s25, 1
      %p85 = por %p83, %p84
      %p86 = scmp.ne.s32.totalorder %s77, %s78
      %p87 = scmp.eq.s32.totalorder %s25, 0
      %p88 = por %p86, %p87
      %p89 = scmp.ne.s32.totalorder %s77, %s78
      %p90 = scmp.eq.s32.totalorder %s26, 1
      %p91 = por %p89, %p90
      %p93 = scmp.ne.s32.totalorder %s78, %s92
      %p94 = scmp.eq.s32.totalorder %s26, 0
      %p95 = por %p93, %p94
      %s97 = sadd.s32 %s96, 1
      %p100 = scmp.eq.s32.totalorder %s20, 1
      %p101 = scmp.ne.s32.totalorder %s96, %s98
      %p102 = scmp.eq.s32.totalorder %s20, 0
      %p103 = por %p101, %p102
      %p104 = scmp.ne.s32.totalorder %s96, %s98
      %p105 = scmp.eq.s32.totalorder %s25, 1
      %p106 = por %p104, %p105
      %p107 = scmp.ne.s32.totalorder %s98, %s99
      %p108 = scmp.eq.s32.totalorder %s25, 0
      %p109 = por %p107, %p108
      %p110 = scmp.ne.s32.totalorder %s98, %s99
      %p111 = scmp.eq.s32.totalorder %s26, 1
      %p112 = por %p110, %p111
      %p114 = scmp.ne.s32.totalorder %s99, %s113
      %p115 = scmp.eq.s32.totalorder %s26, 0
      %p116 = por %p114, %p115
      %s118 = sadd.s32 %s117, 1
      %p121 = scmp.eq.s32.totalorder %s20, 1
      %p122 = scmp.ne.s32.totalorder %s117, %s119
      %p123 = scmp.eq.s32.totalorder %s20, 0
      %p124 = por %p122, %p123
      %p125 = scmp.ne.s32.totalorder %s117, %s119
      %p126 = scmp.eq.s32.totalorder %s25, 1
      %p127 = por %p125, %p126
      %p128 = scmp.ne.s32.totalorder %s119, %s120
      %p129 = scmp.eq.s32.totalorder %s25, 0
      %p130 = por %p128, %p129
      %p131 = scmp.ne.s32.totalorder %s119, %s120
      %p132 = scmp.eq.s32.totalorder %s26, 1
      %p133 = por %p131, %p132
      %p135 = scmp.ne.s32.totalorder %s120, %s134
      %p136 = scmp.eq.s32.totalorder %s26, 0
      %p137 = por %p135, %p136
      %s139 = sadd.s32 %s138, 1
      %p142 = scmp.eq.s32.totalorder %s20, 1
      %p143 = scmp.ne.s32.totalorder %s138, %s140
      %p144 = scmp.eq.s32.totalorder %s20, 0
      %p145 = por %p143, %p144
      %p146 = scmp.ne.s32.totalorder %s138, %s140
      %p147 = scmp.eq.s32.totalorder %s25, 1
      %p148 = por %p146, %p147
      %p149 = scmp.ne.s32.totalorder %s140, %s141
      %p150 = scmp.eq.s32.totalorder %s25, 0
      %p151 = por %p149, %p150
      %p152 = scmp.ne.s32.totalorder %s140, %s141
      %p153 = scmp.eq.s32.totalorder %s26, 1
      %p154 = por %p152, %p153
      %p156 = scmp.ne.s32.totalorder %s141, %s155
      %p157 = scmp.eq.s32.totalorder %s26, 0
      %p158 = por %p156, %p157
      %s160 = sadd.s32 %s159, 1
      %p163 = scmp.eq.s32.totalorder %s20, 1
      %p164 = scmp.ne.s32.totalorder %s159, %s161
      %p165 = scmp.eq.s32.totalorder %s20, 0
      %p166 = por %p164, %p165
      %p167 = scmp.ne.s32.totalorder %s159, %s161
      %p168 = scmp.eq.s32.totalorder %s25, 1
      %p169 = por %p167, %p168
      %p170 = scmp.ne.s32.totalorder %s161, %s162
      %p171 = scmp.eq.s32.totalorder %s25, 0
      %p172 = por %p170, %p171
      %p173 = scmp.ne.s32.totalorder %s161, %s162
      %p174 = scmp.eq.s32.totalorder %s26, 1
      %p175 = por %p173, %p174
      %p177 = scmp.ne.s32.totalorder %s162, %s176
      %p178 = scmp.eq.s32.totalorder %s26, 0
      %p179 = por %p177, %p178
      %s181 = sadd.s32 %s180, 1
      %p184 = scmp.eq.s32.totalorder %s20, 1
      %p185 = scmp.ne.s32.totalorder %s180, %s182
      %p186 = scmp.eq.s32.totalorder %s20, 0
      %p187 = por %p185, %p186
      %p188 = scmp.ne.s32.totalorder %s180, %s182
      %p189 = scmp.eq.s32.totalorder %s25, 1
      %p190 = por %p188, %p189
      %p191 = scmp.ne.s32.totalorder %s182, %s183
      %p192 = scmp.eq.s32.totalorder %s25, 0
      %p193 = por %p191, %p192
      %p194 = scmp.ne.s32.totalorder %s182, %s183
      %p195 = scmp.eq.s32.totalorder %s26, 1
      %p196 = por %p194, %p195
      %p198 = scmp.ne.s32.totalorder %s183, %s197
      %p199 = scmp.eq.s32.totalorder %s26, 0
      %p200 = por %p198, %p199
      %s202 = sadd.s32 %s201, 1
      %p205 = scmp.eq.s32.totalorder %s20, 1
      %p206 = scmp.ne.s32.totalorder %s201, %s203
      %p207 = scmp.eq.s32.totalorder %s20, 0
      %p208 = por %p206, %p207
      %p209 = scmp.ne.s32.totalorder %s201, %s203
      %p210 = scmp.eq.s32.totalorder %s25, 1
      %p211 = por %p209, %p210
      %p212 = scmp.ne.s32.totalorder %s203, %s204
      %p213 = scmp.eq.s32.totalorder %s25, 0
      %p214 = por %p212, %p213
      %p215 = scmp.ne.s32.totalorder %s203, %s204
      %p216 = scmp.eq.s32.totalorder %s26, 1
      %p217 = por %p215, %p216
      %p219 = scmp.ne.s32.totalorder %s204, %s218
      %p220 = scmp.eq.s32.totalorder %s26, 0
      %p221 = por %p219, %p220
      %s222 = ssub.s32 %s20, %s27
      %p223 = scmp.eq.s32.totalorder %s222, 0
      %s225 = sadd.s32 %s224, 1
      %s226 = scalar_select %p223, %s224, %s225
      %p229 = pneg %p223
      %p230 = scmp.eq.s32.totalorder %s20, 1
      %p231 = por %p229, %p230
      %p232 = scmp.ne.s32.totalorder %s224, %s227
      %p233 = scmp.eq.s32.totalorder %s20, 0
      %p234 = por %p232, %p233
      %p235 = scmp.ne.s32.totalorder %s224, %s227
      %p236 = scmp.eq.s32.totalorder %s25, 1
      %p237 = por %p235, %p236
      %p238 = scmp.ne.s32.totalorder %s227, %s228
      %p239 = scmp.eq.s32.totalorder %s25, 0
      %p240 = por %p238, %p239
      %p241 = scmp.ne.s32.totalorder %s227, %s228
      %p242 = scmp.eq.s32.totalorder %s26, 1
      %p243 = por %p241, %p242
      %p245 = scmp.ne.s32.totalorder %s228, %s244
      %p246 = scmp.eq.s32.totalorder %s26, 0
      %p247 = por %p245, %p246
      %p248 = scmp.le.s32.totalorder 1, %s20
      %p249 = scmp.lt.s32.totalorder %s20, 3
      %p250 = pnand %p248, %p249
      %p251 = pneg %p250
      // Predicated region
      $region9: #{tpu_custom_call.1} parent=5 // pred_check
        _
      $region10: #{tpu_custom_call.1} parent=5 // pred_check_branch
        %253 = sbr.rel (%p250) target = $region12
      $region11: #{tpu_custom_call.1} parent=5 // pred_region
        %s254 = ssub.s32 %s20, 1
        // Predicated region
        $region13: #{tpu_custom_call.1} parent=11 // pred_check
          %p255 = pneg %p67
        $region14: #{tpu_custom_call.1} parent=11 // pred_check_branch
          %257 = sbr.rel (%p255) target = $region16
        $region15: #{tpu_custom_call.1} parent=11 // pred_region
          _
        $region16: #{tpu_custom_call.1} parent=11 // pred_fallthru
          _
        // Predicated region
        $region17: #{tpu_custom_call.1} parent=11 // pred_check
          %p258 = pneg %p88
        $region18: #{tpu_custom_call.1} parent=11 // pred_check_branch
          %260 = sbr.rel (%p258) target = $region20
        $region19: #{tpu_custom_call.1} parent=11 // pred_region
          _
        $region20: #{tpu_custom_call.1} parent=11 // pred_fallthru
          _
        // Predicated region
        $region21: #{tpu_custom_call.1} parent=11 // pred_check
          %p261 = pneg %p109
        $region22: #{tpu_custom_call.1} parent=11 // pred_check_branch
          %263 = sbr.rel (%p261) target = $region24
        $region23: #{tpu_custom_call.1} parent=11 // pred_region
          _
        $region24: #{tpu_custom_call.1} parent=11 // pred_fallthru
          _
        // Predicated region
        $region25: #{tpu_custom_call.1} parent=11 // pred_check
          %p264 = pneg %p130
        $region26: #{tpu_custom_call.1} parent=11 // pred_check_branch
          %266 = sbr.rel (%p264) target = $region28
        $region27: #{tpu_custom_call.1} parent=11 // pred_region
          _
        $region28: #{tpu_custom_call.1} parent=11 // pred_fallthru
          _
        // Predicated region
        $region29: #{tpu_custom_call.1} parent=11 // pred_check
          %p267 = pneg %p151
        $region30: #{tpu_custom_call.1} parent=11 // pred_check_branch
          %269 = sbr.rel (%p267) target = $region32
        $region31: #{tpu_custom_call.1} parent=11 // pred_region
          %271 = vsyncadd [#allocation3], 0
          %s272 = sshll.u32 %s5, 4
          %s273 = int_to_ptr.hbm [resolvable:$true] %s272
          %s274 = sshll.u32 [#allocation2], 4
          %s275 = int_to_ptr.vmem [resolvable:$true] %s274
          %280 = dma.hbm_to_vmem [thread:$0]  %s273, 4096, %s275, [#allocation3], 256, 256, 16
        $region32: #{tpu_custom_call.1} parent=11 // pred_fallthru
          _
        // Predicated region
        $region33: #{tpu_custom_call.1} parent=11 // pred_check
          %p281 = pneg %p172
        $region34: #{tpu_custom_call.1} parent=11 // pred_check_branch
          %283 = sbr.rel (%p281) target = $region36
        $region35: #{tpu_custom_call.1} parent=11 // pred_region
          _
        $region36: #{tpu_custom_call.1} parent=11 // pred_fallthru
          _
        // Predicated region
        $region37: #{tpu_custom_call.1} parent=11 // pred_check
          %p284 = pneg %p193
        $region38: #{tpu_custom_call.1} parent=11 // pred_check_branch
          %286 = sbr.rel (%p284) target = $region40
        $region39: #{tpu_custom_call.1} parent=11 // pred_region
          %288 = vsyncadd [#allocation6], 0
          %s289 = sshll.u32 %s7, 4
          %s290 = int_to_ptr.hbm [resolvable:$true] %s289
          %s291 = sshll.u32 [#allocation5], 4
          %s292 = int_to_ptr.vmem [resolvable:$true] %s291
          %297 = dma.hbm_to_vmem [thread:$0]  %s290, 16384, %s292, [#allocation6], 256, 256, 16
        $region40: #{tpu_custom_call.1} parent=11 // pred_fallthru
          _
        // Predicated region
        $region41: #{tpu_custom_call.1} parent=11 // pred_check
          %p298 = pneg %p214
        $region42: #{tpu_custom_call.1} parent=11 // pred_check_branch
          %300 = sbr.rel (%p298) target = $region44
        $region43: #{tpu_custom_call.1} parent=11 // pred_region
          _
        $region44: #{tpu_custom_call.1} parent=11 // pred_fallthru
          _
      $region12: #{tpu_custom_call.1} parent=5 // pred_fallthru
        _
      %p301 = scmp.lt.s32.totalorder %s20, 2
      // Predicated region
      $region45: #{tpu_custom_call.1} parent=5 // pred_check
        %p302 = pneg %p301
      $region46: #{tpu_custom_call.1} parent=5 // pred_check_branch
        %304 = sbr.rel (%p302) target = $region48
      $region47: #{tpu_custom_call.1} parent=5 // pred_region
        // Predicated region
        $region49: #{tpu_custom_call.1} parent=47 // pred_check
          %p305 = pneg %p40
        $region50: #{tpu_custom_call.1} parent=47 // pred_check_branch
          %307 = sbr.rel (%p305) target = $region52
        $region51: #{tpu_custom_call.1} parent=47 // pred_region
          %s308 = smul.u32 2, %s20
          %p309 = scmp.lt.s32.totalorder %s308, 3
          %s310 = scalar_select %p309, %s308, 3
          %s311 = smul.addr %s310, 4
          %s312 = scalar_lea.vmem %s0, %s311
          %s313 = smul.u32 2, %s20
        $region52: #{tpu_custom_call.1} parent=47 // pred_fallthru
          _
      $region48: #{tpu_custom_call.1} parent=5 // pred_fallthru
        _
      %p314 = scmp.le.s32.totalorder 1, %s20
      %p315 = scmp.lt.s32.totalorder %s20, 3
      %p316 = pnand %p314, %p315
      %p317 = pneg %p316
      // Predicated region
      $region53: #{tpu_custom_call.1} parent=5 // pred_check
        _
      $region54: #{tpu_custom_call.1} parent=5 // pred_check_branch
        %319 = sbr.rel (%p316) target = $region56
      $region55: #{tpu_custom_call.1} parent=5 // pred_region
        %s320 = ssub.s32 %s20, 1
        // Predicated region
        $region57: #{tpu_custom_call.1} parent=55 // pred_check
          %p321 = pneg %p151
        $region58: #{tpu_custom_call.1} parent=55 // pred_check_branch
          %323 = sbr.rel (%p321) target = $region60
        $region59: #{tpu_custom_call.1} parent=55 // pred_region
          %325 = dma.done [#allocation3], 4096
        $region60: #{tpu_custom_call.1} parent=55 // pred_fallthru
          _
        // Predicated region
        $region61: #{tpu_custom_call.1} parent=55 // pred_check
          %p326 = pneg %p193
        $region62: #{tpu_custom_call.1} parent=55 // pred_check_branch
          %328 = sbr.rel (%p326) target = $region64
        $region63: #{tpu_custom_call.1} parent=55 // pred_region
          %330 = dma.done [#allocation6], 16384
        $region64: #{tpu_custom_call.1} parent=55 // pred_fallthru
          _
        %s331 = smul.u32 2, %s25
        %p332 = scmp.lt.s32.totalorder %s331, 3
        %s333 = scalar_select %p332, %s331, 3
        %s334 = smul.addr %s333, 4
        %s335 = scalar_lea.vmem %s0, %s334
        %p336 = pneg %p46
        %p337 = pneg %p43
        %p338 = pneg %p67
        %p339 = pneg %p64
        %p340 = pneg %p88
        %p341 = pneg %p85
        %p342 = pneg %p109
        %p343 = pneg %p106
        %p344 = pneg %p130
        %p345 = pneg %p127
        %p346 = pneg %p151
        %p347 = pneg %p148
        %p348 = pneg %p172
        %p349 = pneg %p169
        %p350 = pneg %p193
        %p351 = pneg %p190
        %p352 = pneg %p214
        %p353 = pneg %p211
        %p354 = pneg %p240
        %p355 = pneg %p237
        %s356 = sand.u32 %s227, 1
        %s357 = scalar_lea.sflag [#allocation4], %s356
        %s358 = sand.u32 %s227, 1
        %s359 = smul.addr %s358, 64
        %s360 = scalar_lea.vmem [#allocation7], %s359
        %s361 = smul.u32 2, %s25
        %p362 = scmp.lt.s32.totalorder %s361, 3
        %s363 = scalar_select %p362, %s361, 3
        %s364 = smul.addr %s363, 4
        %s365 = scalar_lea.vmem %s0, %s364
        %s366 = smul.u32 2, %s25
        %s367 = smul.u32 2, %s25
        %v369 = vld [vmem:[%s365] sm:$0xf]
        %v370 = vld [vmem:[%s365 + $0x4] sm:$0xf]
        %v371 = vld [vmem:[%s1] sm:$0xf]
        %v372 = vld [vmem:[%s1 + $0x4] sm:$0xf]
        %v373 = vld [vmem:[%s2] sm:$0x1]
        %v375 = vperm.slane %v373, 0
        %v379 = vunpack.c.l.b16 %v369
        %v380 = vunpack.c.l.b16 %v370
        %v381 = vpack.c.b16 %v380, %v379
        %v384 = vunpack.c.l.b16 %v371
        %v385 = vunpack.c.l.b16 %v372
        %v386 = vpack.c.b16 %v385, %v384
        %vm388 = vcmask 130048
        %v390 = vsel %vm388, %v381, 0
        %392 = vmatpush.bf16.msra.mxu0 0
        %393 = vmatpush.bf16.msra.mxu0 0
        %394 = vmatpush.bf16.msra.mxu0 0
        %395 = vmatpush.bf16.msra.mxu0 0
        %396 = vmatpush.bf16.msra.mxu0 0
        %397 = vmatpush.bf16.msra.mxu0 0
        %398 = vmatpush.bf16.msra.mxu0 0
        %399 = vmatpush.bf16.msra.mxu0 %v386
        %400 = vmatmul.bf16.gmra.mxu0 %v390
        %v401 = vpop.f32.mrf.mxu0
        %v402 = vadd.f32 %v375, %v401
        %v403 = vpop.f32.mrf.mxu0
        %v404 = vadd.f32 %v375, %v403
        %405 = vdwg.mxu0
        %406 = vadd.xlane.f32.xlu0 %v402
        %v407 = vpop.xlane.xlu0 %406
        %408 = vadd.xlane.f32.xlu0 %v404
        %v409 = vpop.xlane.xlu0 %408
        %v410 = vrcp.pop 128.0
        %v411 = vmul.f32 128.0, %v410
        %v412 = vsub.f32 1.0, %v411
        %v413 = vmul.f32 %v410, %v412
        %v414 = vadd.f32 %v410, %v413
        %vm415 = vweird.f32 %v410
        %v416 = vsel %vm415, %v410, %v414
        %v417 = vmul.f32 %v407, %v416
        %v418 = vmul.f32 %v409, %v416
        %v419 = vsub.f32 %v402, %v417
        %v420 = vsub.f32 %v404, %v418
        %v421 = vmul.f32 %v419, %v419
        %v422 = vmul.f32 %v420, %v420
        %423 = vadd.xlane.f32.xlu0 %v421
        %v424 = vpop.xlane.xlu0 %423
        %425 = vadd.xlane.f32.xlu0 %v422
        %v426 = vpop.xlane.xlu0 %425
        %v427 = vmul.f32 %v424, %v416
        %v428 = vmul.f32 %v426, %v416
        %v429 = vadd.f32 %v427, 1e-05
        %v430 = vadd.f32 %v428, 1e-05
        %v431 = vrsqrt.pop %v429
        %v432 = vmul.f32 %v431, %v429
        %v433 = vmul.f32 %v432, %v431
        %v434 = vmul.f32 0.5, %v433
        %v435 = vsub.f32 1.5, %v434
        %v436 = vmul.f32 %v431, %v435
        %vm437 = vweird.f32 %v429
        %vm438 = vweird.f32 %v431
        %vm439 = vmor %vm437, %vm438
        %v440 = vsel %vm439, %v431, %v436
        %v441 = vrsqrt.pop %v430
        %v442 = vmul.f32 %v441, %v430
        %v443 = vmul.f32 %v442, %v441
        %v444 = vmul.f32 0.5, %v443
        %v445 = vsub.f32 1.5, %v444
        %v446 = vmul.f32 %v441, %v445
        %vm447 = vweird.f32 %v430
        %vm448 = vweird.f32 %v441
        %vm449 = vmor %vm447, %vm448
        %v450 = vsel %vm449, %v441, %v446
        %v451 = vmul.f32 %v419, %v440
        %v452 = vmul.f32 %v420, %v450
        %v453 = vld [vmem:[%s3] sm:$0x1]
        %v455 = vperm.slane %v453, 0
        %v457 = vmul.f32 %v451, %v455
        %v458 = vmul.f32 %v452, %v455
        %v459 = vld [vmem:[%s4] sm:$0x1]
        %v461 = vperm.slane %v459, 0
        %v463 = vadd.f32 %v457, %v461
        %v464 = vadd.f32 %v458, %v461
        %v465 = vpack.c.bf16 %v464, %v463
        %v466 = vld [vmem:[#allocation2] sm:$0xff]
        %v467 = vld [vmem:[#allocation2 + $0x8] sm:$0xff]
        %v468 = vld [vmem:[#allocation2 + $0x10] sm:$0xff]
        %v469 = vld [vmem:[#allocation2 + $0x18] sm:$0xff]
        %v470 = vld [vmem:[#allocation2 + $0x20] sm:$0xff]
        %v471 = vld [vmem:[#allocation2 + $0x28] sm:$0xff]
        %v472 = vld [vmem:[#allocation2 + $0x30] sm:$0xff]
        %v473 = vld [vmem:[#allocation2 + $0x38] sm:$0xff]
        %v474 = vld [vmem:[#allocation2 + $0x40] sm:$0xff]
        %v475 = vld [vmem:[#allocation2 + $0x48] sm:$0xff]
        %v476 = vld [vmem:[#allocation2 + $0x50] sm:$0xff]
        %v477 = vld [vmem:[#allocation2 + $0x58] sm:$0xff]
        %v478 = vld [vmem:[#allocation2 + $0x60] sm:$0xff]
        %v479 = vld [vmem:[#allocation2 + $0x68] sm:$0xff]
        %v480 = vld [vmem:[#allocation2 + $0x70] sm:$0xff]
        %v481 = vld [vmem:[#allocation2 + $0x78] sm:$0xff]
        %v482 = vld [vmem:[#allocation2 + $0x80] sm:$0xff]
        %v483 = vld [vmem:[#allocation2 + $0x88] sm:$0xff]
        %v484 = vld [vmem:[#allocation2 + $0x90] sm:$0xff]
        %v485 = vld [vmem:[#allocation2 + $0x98] sm:$0xff]
        %v486 = vld [vmem:[#allocation2 + $0xa0] sm:$0xff]
        %v487 = vld [vmem:[#allocation2 + $0xa8] sm:$0xff]
        %v488 = vld [vmem:[#allocation2 + $0xb0] sm:$0xff]
        %v489 = vld [vmem:[#allocation2 + $0xb8] sm:$0xff]
        %v490 = vld [vmem:[#allocation2 + $0xc0] sm:$0xff]
        %v491 = vld [vmem:[#allocation2 + $0xc8] sm:$0xff]
        %v492 = vld [vmem:[#allocation2 + $0xd0] sm:$0xff]
        %v493 = vld [vmem:[#allocation2 + $0xd8] sm:$0xff]
        %v494 = vld [vmem:[#allocation2 + $0xe0] sm:$0xff]
        %v495 = vld [vmem:[#allocation2 + $0xe8] sm:$0xff]
        %v496 = vld [vmem:[#allocation2 + $0xf0] sm:$0xff]
        %v497 = vld [vmem:[#allocation2 + $0xf8] sm:$0xff]
        %v498 = vld [vmem:[%s6] sm:$0xf]
        %v500 = vperm.slane %v498, 0
        %v501 = vperm.slane %v498, 1
        %v502 = vperm.slane %v498, 2
        %v503 = vperm.slane %v498, 3
        %v540 = vunpack.c.l.b16 %v466
        %v541 = vunpack.c.h.b16 %v466
        %v542 = vunpack.c.l.b16 %v467
        %v543 = vunpack.c.h.b16 %v467
        %v544 = vunpack.c.l.b16 %v468
        %v545 = vunpack.c.h.b16 %v468
        %v546 = vunpack.c.l.b16 %v469
        %v547 = vunpack.c.h.b16 %v469
        %v548 = vunpack.c.l.b16 %v470
        %v549 = vunpack.c.h.b16 %v470
        %v550 = vunpack.c.l.b16 %v471
        %v551 = vunpack.c.h.b16 %v471
        %v552 = vunpack.c.l.b16 %v472
        %v553 = vunpack.c.h.b16 %v472
        %v554 = vunpack.c.l.b16 %v473
        %v555 = vunpack.c.h.b16 %v473
        %v556 = vunpack.c.l.b16 %v474
        %v557 = vunpack.c.h.b16 %v474
        %v558 = vunpack.c.l.b16 %v475
        %v559 = vunpack.c.h.b16 %v475
        %v560 = vunpack.c.l.b16 %v476
        %v561 = vunpack.c.h.b16 %v476
        %v562 = vunpack.c.l.b16 %v477
        %v563 = vunpack.c.h.b16 %v477
        %v564 = vunpack.c.l.b16 %v478
        %v565 = vunpack.c.h.b16 %v478
        %v566 = vunpack.c.l.b16 %v479
        %v567 = vunpack.c.h.b16 %v479
        %v568 = vunpack.c.l.b16 %v480
        %v569 = vunpack.c.h.b16 %v480
        %v570 = vunpack.c.l.b16 %v481
        %v571 = vunpack.c.h.b16 %v481
        %v572 = vunpack.c.l.b16 %v482
        %v573 = vunpack.c.h.b16 %v482
        %v574 = vunpack.c.l.b16 %v483
        %v575 = vunpack.c.h.b16 %v483
        %v576 = vunpack.c.l.b16 %v484
        %v577 = vunpack.c.h.b16 %v484
        %v578 = vunpack.c.l.b16 %v485
        %v579 = vunpack.c.h.b16 %v485
        %v580 = vunpack.c.l.b16 %v486
        %v581 = vunpack.c.h.b16 %v486
        %v582 = vunpack.c.l.b16 %v487
        %v583 = vunpack.c.h.b16 %v487
        %v584 = vunpack.c.l.b16 %v488
        %v585 = vunpack.c.h.b16 %v488
        %v586 = vunpack.c.l.b16 %v489
        %v587 = vunpack.c.h.b16 %v489
        %v588 = vunpack.c.l.b16 %v490
        %v589 = vunpack.c.h.b16 %v490
        %v590 = vunpack.c.l.b16 %v491
        %v591 = vunpack.c.h.b16 %v491
        %v592 = vunpack.c.l.b16 %v492
        %v593 = vunpack.c.h.b16 %v492
        %v594 = vunpack.c.l.b16 %v493
        %v595 = vunpack.c.h.b16 %v493
        %v596 = vunpack.c.l.b16 %v494
        %v597 = vunpack.c.h.b16 %v494
        %v598 = vunpack.c.l.b16 %v495
        %v599 = vunpack.c.h.b16 %v495
        %v600 = vunpack.c.l.b16 %v496
        %v601 = vunpack.c.h.b16 %v496
        %v602 = vunpack.c.l.b16 %v497
        %v603 = vunpack.c.h.b16 %v497
        %v604 = vpack.c.b16 %v544, %v540
        %v605 = vpack.c.b16 %v545, %v541
        %v606 = vpack.c.b16 %v546, %v542
        %v607 = vpack.c.b16 %v547, %v543
        %v608 = vpack.c.b16 %v552, %v548
        %v609 = vpack.c.b16 %v553, %v549
        %v610 = vpack.c.b16 %v554, %v550
        %v611 = vpack.c.b16 %v555, %v551
        %v612 = vpack.c.b16 %v560, %v556
        %v613 = vpack.c.b16 %v561, %v557
        %v614 = vpack.c.b16 %v562, %v558
        %v615 = vpack.c.b16 %v563, %v559
        %v616 = vpack.c.b16 %v568, %v564
        %v617 = vpack.c.b16 %v569, %v565
        %v618 = vpack.c.b16 %v570, %v566
        %v619 = vpack.c.b16 %v571, %v567
        %v620 = vpack.c.b16 %v576, %v572
        %v621 = vpack.c.b16 %v577, %v573
        %v622 = vpack.c.b16 %v578, %v574
        %v623 = vpack.c.b16 %v579, %v575
        %v624 = vpack.c.b16 %v584, %v580
        %v625 = vpack.c.b16 %v585, %v581
        %v626 = vpack.c.b16 %v586, %v582
        %v627 = vpack.c.b16 %v587, %v583
        %v628 = vpack.c.b16 %v592, %v588
        %v629 = vpack.c.b16 %v593, %v589
        %v630 = vpack.c.b16 %v594, %v590
        %v631 = vpack.c.b16 %v595, %v591
        %v632 = vpack.c.b16 %v600, %v596
        %v633 = vpack.c.b16 %v601, %v597
        %v634 = vpack.c.b16 %v602, %v598
        %v635 = vpack.c.b16 %v603, %v599
        %668 = vmatpush.bf16.msra.mxu0 %v632
        %669 = vmatpush.bf16.msra.mxu0 %v628
        %670 = vmatpush.bf16.msra.mxu0 %v624
        %671 = vmatpush.bf16.msra.mxu0 %v620
        %672 = vmatpush.bf16.msra.mxu0 %v616
        %673 = vmatpush.bf16.msra.mxu0 %v612
        %674 = vmatpush.bf16.msra.mxu0 %v608
        %675 = vmatpush.bf16.msra.mxu0 %v604
        %676 = vmatmul.bf16.gmra.mxu0 %v465
        %v677 = vpop.f32.mrf.mxu0
        %v678 = vadd.f32 %v500, %v677
        %v679 = vpop.f32.mrf.mxu0
        %v680 = vadd.f32 %v500, %v679
        %681 = vdwg.mxu0
        %682 = vmatpush.bf16.msra.mxu0 %v633
        %683 = vmatpush.bf16.msra.mxu0 %v629
        %684 = vmatpush.bf16.msra.mxu0 %v625
        %685 = vmatpush.bf16.msra.mxu0 %v621
        %686 = vmatpush.bf16.msra.mxu0 %v617
        %687 = vmatpush.bf16.msra.mxu0 %v613
        %688 = vmatpush.bf16.msra.mxu0 %v609
        %689 = vmatpush.bf16.msra.mxu0 %v605
        %690 = vmatmul.bf16.gmra.mxu0 %v465
        %v691 = vpop.f32.mrf.mxu0
        %v692 = vadd.f32 %v501, %v691
        %v693 = vpop.f32.mrf.mxu0
        %v694 = vadd.f32 %v501, %v693
        %695 = vdwg.mxu0
        %696 = vmatpush.bf16.msra.mxu0 %v634
        %697 = vmatpush.bf16.msra.mxu0 %v630
        %698 = vmatpush.bf16.msra.mxu0 %v626
        %699 = vmatpush.bf16.msra.mxu0 %v622
        %700 = vmatpush.bf16.msra.mxu0 %v618
        %701 = vmatpush.bf16.msra.mxu0 %v614
        %702 = vmatpush.bf16.msra.mxu0 %v610
        %703 = vmatpush.bf16.msra.mxu0 %v606
        %704 = vmatmul.bf16.gmra.mxu0 %v465
        %v705 = vpop.f32.mrf.mxu0
        %v706 = vadd.f32 %v502, %v705
        %v707 = vpop.f32.mrf.mxu0
        %v708 = vadd.f32 %v502, %v707
        %709 = vdwg.mxu0
        %710 = vmatpush.bf16.msra.mxu0 %v635
        %711 = vmatpush.bf16.msra.mxu0 %v631
        %712 = vmatpush.bf16.msra.mxu0 %v627
        %713 = vmatpush.bf16.msra.mxu0 %v623
        %714 = vmatpush.bf16.msra.mxu0 %v619
        %715 = vmatpush.bf16.msra.mxu0 %v615
        %716 = vmatpush.bf16.msra.mxu0 %v611
        %717 = vmatpush.bf16.msra.mxu0 %v607
        %718 = vmatmul.bf16.gmra.mxu0 %v465
        %v719 = vpop.f32.mrf.mxu0
        %v720 = vadd.f32 %v503, %v719
        %v721 = vpop.f32.mrf.mxu0
        %v722 = vadd.f32 %v503, %v721
        %723 = vdwg.mxu0
        %v724 = vmax.f32 %v678, 0.0
        %v725 = vmax.f32 %v692, 0.0
        %v726 = vmax.f32 %v706, 0.0
        %v727 = vmax.f32 %v720, 0.0
        %v728 = vmax.f32 %v680, 0.0
        %v729 = vmax.f32 %v694, 0.0
        %v730 = vmax.f32 %v708, 0.0
        %v731 = vmax.f32 %v722, 0.0
        %v732 = vpack.c.bf16 %v728, %v724
        %v733 = vpack.c.bf16 %v729, %v725
        %v734 = vpack.c.bf16 %v730, %v726
        %v735 = vpack.c.bf16 %v731, %v727
        %v736 = vld [vmem:[#allocation5] sm:$0xff]
        %v737 = vld [vmem:[#allocation5 + $0x8] sm:$0xff]
        %v738 = vld [vmem:[#allocation5 + $0x10] sm:$0xff]
        %v739 = vld [vmem:[#allocation5 + $0x18] sm:$0xff]
        %v740 = vld [vmem:[#allocation5 + $0x20] sm:$0xff]
        %v741 = vld [vmem:[#allocation5 + $0x28] sm:$0xff]
        %v742 = vld [vmem:[#allocation5 + $0x30] sm:$0xff]
        %v743 = vld [vmem:[#allocation5 + $0x38] sm:$0xff]
        %v744 = vld [vmem:[#allocation5 + $0x40] sm:$0xff]
        %v745 = vld [vmem:[#allocation5 + $0x48] sm:$0xff]
        %v746 = vld [vmem:[#allocation5 + $0x50] sm:$0xff]
        %v747 = vld [vmem:[#allocation5 + $0x58] sm:$0xff]
        %v748 = vld [vmem:[#allocation5 + $0x60] sm:$0xff]
        %v749 = vld [vmem:[#allocation5 + $0x68] sm:$0xff]
        %v750 = vld [vmem:[#allocation5 + $0x70] sm:$0xff]
        %v751 = vld [vmem:[#allocation5 + $0x78] sm:$0xff]
        %v752 = vld [vmem:[#allocation5 + $0x80] sm:$0xff]
        %v753 = vld [vmem:[#allocation5 + $0x88] sm:$0xff]
        %v754 = vld [vmem:[#allocation5 + $0x90] sm:$0xff]
        %v755 = vld [vmem:[#allocation5 + $0x98] sm:$0xff]
        %v756 = vld [vmem:[#allocation5 + $0xa0] sm:$0xff]
        %v757 = vld [vmem:[#allocation5 + $0xa8] sm:$0xff]
        %v758 = vld [vmem:[#allocation5 + $0xb0] sm:$0xff]
        %v759 = vld [vmem:[#allocation5 + $0xb8] sm:$0xff]
        %v760 = vld [vmem:[#allocation5 + $0xc0] sm:$0xff]
        %v761 = vld [vmem:[#allocation5 + $0xc8] sm:$0xff]
        %v762 = vld [vmem:[#allocation5 + $0xd0] sm:$0xff]
        %v763 = vld [vmem:[#allocation5 + $0xd8] sm:$0xff]
        %v764 = vld [vmem:[#allocation5 + $0xe0] sm:$0xff]
        %v765 = vld [vmem:[#allocation5 + $0xe8] sm:$0xff]
        %v766 = vld [vmem:[#allocation5 + $0xf0] sm:$0xff]
        %v767 = vld [vmem:[#allocation5 + $0xf8] sm:$0xff]
        %v768 = vld [vmem:[#allocation5 + $0x100] sm:$0xff]
        %v769 = vld [vmem:[#allocation5 + $0x108] sm:$0xff]
        %v770 = vld [vmem:[#allocation5 + $0x110] sm:$0xff]
        %v771 = vld [vmem:[#allocation5 + $0x118] sm:$0xff]
        %v772 = vld [vmem:[#allocation5 + $0x120] sm:$0xff]
        %v773 = vld [vmem:[#allocation5 + $0x128] sm:$0xff]
        %v774 = vld [vmem:[#allocation5 + $0x130] sm:$0xff]
        %v775 = vld [vmem:[#allocation5 + $0x138] sm:$0xff]
        %v776 = vld [vmem:[#allocation5 + $0x140] sm:$0xff]
        %v777 = vld [vmem:[#allocation5 + $0x148] sm:$0xff]
        %v778 = vld [vmem:[#allocation5 + $0x150] sm:$0xff]
        %v779 = vld [vmem:[#allocation5 + $0x158] sm:$0xff]
        %v780 = vld [vmem:[#allocation5 + $0x160] sm:$0xff]
        %v781 = vld [vmem:[#allocation5 + $0x168] sm:$0xff]
        %v782 = vld [vmem:[#allocation5 + $0x170] sm:$0xff]
        %v783 = vld [vmem:[#allocation5 + $0x178] sm:$0xff]
        %v784 = vld [vmem:[#allocation5 + $0x180] sm:$0xff]
        %v785 = vld [vmem:[#allocation5 + $0x188] sm:$0xff]
        %v786 = vld [vmem:[#allocation5 + $0x190] sm:$0xff]
        %v787 = vld [vmem:[#allocation5 + $0x198] sm:$0xff]
        %v788 = vld [vmem:[#allocation5 + $0x1a0] sm:$0xff]
        %v789 = vld [vmem:[#allocation5 + $0x1a8] sm:$0xff]
        %v790 = vld [vmem:[#allocation5 + $0x1b0] sm:$0xff]
        %v791 = vld [vmem:[#allocation5 + $0x1b8] sm:$0xff]
        %v792 = vld [vmem:[#allocation5 + $0x1c0] sm:$0xff]
        %v793 = vld [vmem:[#allocation5 + $0x1c8] sm:$0xff]
        %v794 = vld [vmem:[#allocation5 + $0x1d0] sm:$0xff]
        %v795 = vld [vmem:[#allocation5 + $0x1d8] sm:$0xff]
        %v796 = vld [vmem:[#allocation5 + $0x1e0] sm:$0xff]
        %v797 = vld [vmem:[#allocation5 + $0x1e8] sm:$0xff]
        %v798 = vld [vmem:[#allocation5 + $0x1f0] sm:$0xff]
        %v799 = vld [vmem:[#allocation5 + $0x1f8] sm:$0xff]
        %v800 = vld [vmem:[#allocation5 + $0x200] sm:$0xff]
        %v801 = vld [vmem:[#allocation5 + $0x208] sm:$0xff]
        %v802 = vld [vmem:[#allocation5 + $0x210] sm:$0xff]
        %v803 = vld [vmem:[#allocation5 + $0x218] sm:$0xff]
        %v804 = vld [vmem:[#allocation5 + $0x220] sm:$0xff]
        %v805 = vld [vmem:[#allocation5 + $0x228] sm:$0xff]
        %v806 = vld [vmem:[#allocation5 + $0x230] sm:$0xff]
        %v807 = vld [vmem:[#allocation5 + $0x238] sm:$0xff]
        %v808 = vld [vmem:[#allocation5 + $0x240] sm:$0xff]
        %v809 = vld [vmem:[#allocation5 + $0x248] sm:$0xff]
        %v810 = vld [vmem:[#allocation5 + $0x250] sm:$0xff]
        %v811 = vld [vmem:[#allocation5 + $0x258] sm:$0xff]
        %v812 = vld [vmem:[#allocation5 + $0x260] sm:$0xff]
        %v813 = vld [vmem:[#allocation5 + $0x268] sm:$0xff]
        %v814 = vld [vmem:[#allocation5 + $0x270] sm:$0xff]
        %v815 = vld [vmem:[#allocation5 + $0x278] sm:$0xff]
        %v816 = vld [vmem:[#allocation5 + $0x280] sm:$0xff]
        %v817 = vld [vmem:[#allocation5 + $0x288] sm:$0xff]
        %v818 = vld [vmem:[#allocation5 + $0x290] sm:$0xff]
        %v819 = vld [vmem:[#allocation5 + $0x298] sm:$0xff]
        %v820 = vld [vmem:[#allocation5 + $0x2a0] sm:$0xff]
        %v821 = vld [vmem:[#allocation5 + $0x2a8] sm:$0xff]
        %v822 = vld [vmem:[#allocation5 + $0x2b0] sm:$0xff]
        %v823 = vld [vmem:[#allocation5 + $0x2b8] sm:$0xff]
        %v824 = vld [vmem:[#allocation5 + $0x2c0] sm:$0xff]
        %v825 = vld [vmem:[#allocation5 + $0x2c8] sm:$0xff]
        %v826 = vld [vmem:[#allocation5 + $0x2d0] sm:$0xff]
        %v827 = vld [vmem:[#allocation5 + $0x2d8] sm:$0xff]
        %v828 = vld [vmem:[#allocation5 + $0x2e0] sm:$0xff]
        %v829 = vld [vmem:[#allocation5 + $0x2e8] sm:$0xff]
        %v830 = vld [vmem:[#allocation5 + $0x2f0] sm:$0xff]
        %v831 = vld [vmem:[#allocation5 + $0x2f8] sm:$0xff]
        %v832 = vld [vmem:[#allocation5 + $0x300] sm:$0xff]
        %v833 = vld [vmem:[#allocation5 + $0x308] sm:$0xff]
        %v834 = vld [vmem:[#allocation5 + $0x310] sm:$0xff]
        %v835 = vld [vmem:[#allocation5 + $0x318] sm:$0xff]
        %v836 = vld [vmem:[#allocation5 + $0x320] sm:$0xff]
        %v837 = vld [vmem:[#allocation5 + $0x328] sm:$0xff]
        %v838 = vld [vmem:[#allocation5 + $0x330] sm:$0xff]
        %v839 = vld [vmem:[#allocation5 + $0x338] sm:$0xff]
        %v840 = vld [vmem:[#allocation5 + $0x340] sm:$0xff]
        %v841 = vld [vmem:[#allocation5 + $0x348] sm:$0xff]
        %v842 = vld [vmem:[#allocation5 + $0x350] sm:$0xff]
        %v843 = vld [vmem:[#allocation5 + $0x358] sm:$0xff]
        %v844 = vld [vmem:[#allocation5 + $0x360] sm:$0xff]
        %v845 = vld [vmem:[#allocation5 + $0x368] sm:$0xff]
        %v846 = vld [vmem:[#allocation5 + $0x370] sm:$0xff]
        %v847 = vld [vmem:[#allocation5 + $0x378] sm:$0xff]
        %v848 = vld [vmem:[#allocation5 + $0x380] sm:$0xff]
        %v849 = vld [vmem:[#allocation5 + $0x388] sm:$0xff]
        %v850 = vld [vmem:[#allocation5 + $0x390] sm:$0xff]
        %v851 = vld [vmem:[#allocation5 + $0x398] sm:$0xff]
        %v852 = vld [vmem:[#allocation5 + $0x3a0] sm:$0xff]
        %v853 = vld [vmem:[#allocation5 + $0x3a8] sm:$0xff]
        %v854 = vld [vmem:[#allocation5 + $0x3b0] sm:$0xff]
        %v855 = vld [vmem:[#allocation5 + $0x3b8] sm:$0xff]
        %v856 = vld [vmem:[#allocation5 + $0x3c0] sm:$0xff]
        %v857 = vld [vmem:[#allocation5 + $0x3c8] sm:$0xff]
        %v858 = vld [vmem:[#allocation5 + $0x3d0] sm:$0xff]
        %v859 = vld [vmem:[#allocation5 + $0x3d8] sm:$0xff]
        %v860 = vld [vmem:[#allocation5 + $0x3e0] sm:$0xff]
        %v861 = vld [vmem:[#allocation5 + $0x3e8] sm:$0xff]
        %v862 = vld [vmem:[#allocation5 + $0x3f0] sm:$0xff]
        %v863 = vld [vmem:[#allocation5 + $0x3f8] sm:$0xff]
        %v864 = vld [vmem:[%s8] sm:$0xf]
        %v866 = vperm.slane %v864, 0
        %v867 = vperm.slane %v864, 1
        %v868 = vperm.slane %v864, 2
        %v869 = vperm.slane %v864, 3
        %v1002 = vunpack.c.l.b16 %v736
        %v1003 = vunpack.c.h.b16 %v736
        %v1004 = vunpack.c.l.b16 %v737
        %v1005 = vunpack.c.h.b16 %v737
        %v1006 = vunpack.c.l.b16 %v738
        %v1007 = vunpack.c.h.b16 %v738
        %v1008 = vunpack.c.l.b16 %v739
        %v1009 = vunpack.c.h.b16 %v739
        %v1010 = vunpack.c.l.b16 %v740
        %v1011 = vunpack.c.h.b16 %v740
        %v1012 = vunpack.c.l.b16 %v741
        %v1013 = vunpack.c.h.b16 %v741
        %v1014 = vunpack.c.l.b16 %v742
        %v1015 = vunpack.c.h.b16 %v742
        %v1016 = vunpack.c.l.b16 %v743
        %v1017 = vunpack.c.h.b16 %v743
        %v1018 = vunpack.c.l.b16 %v744
        %v1019 = vunpack.c.h.b16 %v744
        %v1020 = vunpack.c.l.b16 %v745
        %v1021 = vunpack.c.h.b16 %v745
        %v1022 = vunpack.c.l.b16 %v746
        %v1023 = vunpack.c.h.b16 %v746
        %v1024 = vunpack.c.l.b16 %v747
        %v1025 = vunpack.c.h.b16 %v747
        %v1026 = vunpack.c.l.b16 %v748
        %v1027 = vunpack.c.h.b16 %v748
        %v1028 = vunpack.c.l.b16 %v749
        %v1029 = vunpack.c.h.b16 %v749
        %v1030 = vunpack.c.l.b16 %v750
        %v1031 = vunpack.c.h.b16 %v750
        %v1032 = vunpack.c.l.b16 %v751
        %v1033 = vunpack.c.h.b16 %v751
        %v1034 = vunpack.c.l.b16 %v752
        %v1035 = vunpack.c.h.b16 %v752
        %v1036 = vunpack.c.l.b16 %v753
        %v1037 = vunpack.c.h.b16 %v753
        %v1038 = vunpack.c.l.b16 %v754
        %v1039 = vunpack.c.h.b16 %v754
        %v1040 = vunpack.c.l.b16 %v755
        %v1041 = vunpack.c.h.b16 %v755
        %v1042 = vunpack.c.l.b16 %v756
        %v1043 = vunpack.c.h.b16 %v756
        %v1044 = vunpack.c.l.b16 %v757
        %v1045 = vunpack.c.h.b16 %v757
        %v1046 = vunpack.c.l.b16 %v758
        %v1047 = vunpack.c.h.b16 %v758
        %v1048 = vunpack.c.l.b16 %v759
        %v1049 = vunpack.c.h.b16 %v759
        %v1050 = vunpack.c.l.b16 %v760
        %v1051 = vunpack.c.h.b16 %v760
        %v1052 = vunpack.c.l.b16 %v761
        %v1053 = vunpack.c.h.b16 %v761
        %v1054 = vunpack.c.l.b16 %v762
        %v1055 = vunpack.c.h.b16 %v762
        %v1056 = vunpack.c.l.b16 %v763
        %v1057 = vunpack.c.h.b16 %v763
        %v1058 = vunpack.c.l.b16 %v764
        %v1059 = vunpack.c.h.b16 %v764
        %v1060 = vunpack.c.l.b16 %v765
        %v1061 = vunpack.c.h.b16 %v765
        %v1062 = vunpack.c.l.b16 %v766
        %v1063 = vunpack.c.h.b16 %v766
        %v1064 = vunpack.c.l.b16 %v767
        %v1065 = vunpack.c.h.b16 %v767
        %v1066 = vunpack.c.l.b16 %v768
        %v1067 = vunpack.c.h.b16 %v768
        %v1068 = vunpack.c.l.b16 %v769
        %v1069 = vunpack.c.h.b16 %v769
        %v1070 = vunpack.c.l.b16 %v770
        %v1071 = vunpack.c.h.b16 %v770
        %v1072 = vunpack.c.l.b16 %v771
        %v1073 = vunpack.c.h.b16 %v771
        %v1074 = vunpack.c.l.b16 %v772
        %v1075 = vunpack.c.h.b16 %v772
        %v1076 = vunpack.c.l.b16 %v773
        %v1077 = vunpack.c.h.b16 %v773
        %v1078 = vunpack.c.l.b16 %v774
        %v1079 = vunpack.c.h.b16 %v774
        %v1080 = vunpack.c.l.b16 %v775
        %v1081 = vunpack.c.h.b16 %v775
        %v1082 = vunpack.c.l.b16 %v776
        %v1083 = vunpack.c.h.b16 %v776
        %v1084 = vunpack.c.l.b16 %v777
        %v1085 = vunpack.c.h.b16 %v777
        %v1086 = vunpack.c.l.b16 %v778
        %v1087 = vunpack.c.h.b16 %v778
        %v1088 = vunpack.c.l.b16 %v779
        %v1089 = vunpack.c.h.b16 %v779
        %v1090 = vunpack.c.l.b16 %v780
        %v1091 = vunpack.c.h.b16 %v780
        %v1092 = vunpack.c.l.b16 %v781
        %v1093 = vunpack.c.h.b16 %v781
        %v1094 = vunpack.c.l.b16 %v782
        %v1095 = vunpack.c.h.b16 %v782
        %v1096 = vunpack.c.l.b16 %v783
        %v1097 = vunpack.c.h.b16 %v783
        %v1098 = vunpack.c.l.b16 %v784
        %v1099 = vunpack.c.h.b16 %v784
        %v1100 = vunpack.c.l.b16 %v785
        %v1101 = vunpack.c.h.b16 %v785
        %v1102 = vunpack.c.l.b16 %v786
        %v1103 = vunpack.c.h.b16 %v786
        %v1104 = vunpack.c.l.b16 %v787
        %v1105 = vunpack.c.h.b16 %v787
        %v1106 = vunpack.c.l.b16 %v788
        %v1107 = vunpack.c.h.b16 %v788
        %v1108 = vunpack.c.l.b16 %v789
        %v1109 = vunpack.c.h.b16 %v789
        %v1110 = vunpack.c.l.b16 %v790
        %v1111 = vunpack.c.h.b16 %v790
        %v1112 = vunpack.c.l.b16 %v791
        %v1113 = vunpack.c.h.b16 %v791
        %v1114 = vunpack.c.l.b16 %v792
        %v1115 = vunpack.c.h.b16 %v792
        %v1116 = vunpack.c.l.b16 %v793
        %v1117 = vunpack.c.h.b16 %v793
        %v1118 = vunpack.c.l.b16 %v794
        %v1119 = vunpack.c.h.b16 %v794
        %v1120 = vunpack.c.l.b16 %v795
        %v1121 = vunpack.c.h.b16 %v795
        %v1122 = vunpack.c.l.b16 %v796
        %v1123 = vunpack.c.h.b16 %v796
        %v1124 = vunpack.c.l.b16 %v797
        %v1125 = vunpack.c.h.b16 %v797
        %v1126 = vunpack.c.l.b16 %v798
        %v1127 = vunpack.c.h.b16 %v798
        %v1128 = vunpack.c.l.b16 %v799
        %v1129 = vunpack.c.h.b16 %v799
        %v1130 = vunpack.c.l.b16 %v800
        %v1131 = vunpack.c.h.b16 %v800
        %v1132 = vunpack.c.l.b16 %v801
        %v1133 = vunpack.c.h.b16 %v801
        %v1134 = vunpack.c.l.b16 %v802
        %v1135 = vunpack.c.h.b16 %v802
        %v1136 = vunpack.c.l.b16 %v803
        %v1137 = vunpack.c.h.b16 %v803
        %v1138 = vunpack.c.l.b16 %v804
        %v1139 = vunpack.c.h.b16 %v804
        %v1140 = vunpack.c.l.b16 %v805
        %v1141 = vunpack.c.h.b16 %v805
        %v1142 = vunpack.c.l.b16 %v806
        %v1143 = vunpack.c.h.b16 %v806
        %v1144 = vunpack.c.l.b16 %v807
        %v1145 = vunpack.c.h.b16 %v807
        %v1146 = vunpack.c.l.b16 %v808
        %v1147 = vunpack.c.h.b16 %v808
        %v1148 = vunpack.c.l.b16 %v809
        %v1149 = vunpack.c.h.b16 %v809
        %v1150 = vunpack.c.l.b16 %v810
        %v1151 = vunpack.c.h.b16 %v810
        %v1152 = vunpack.c.l.b16 %v811
        %v1153 = vunpack.c.h.b16 %v811
        %v1154 = vunpack.c.l.b16 %v812
        %v1155 = vunpack.c.h.b16 %v812
        %v1156 = vunpack.c.l.b16 %v813
        %v1157 = vunpack.c.h.b16 %v813
        %v1158 = vunpack.c.l.b16 %v814
        %v1159 = vunpack.c.h.b16 %v814
        %v1160 = vunpack.c.l.b16 %v815
        %v1161 = vunpack.c.h.b16 %v815
        %v1162 = vunpack.c.l.b16 %v816
        %v1163 = vunpack.c.h.b16 %v816
        %v1164 = vunpack.c.l.b16 %v817
        %v1165 = vunpack.c.h.b16 %v817
        %v1166 = vunpack.c.l.b16 %v818
        %v1167 = vunpack.c.h.b16 %v818
        %v1168 = vunpack.c.l.b16 %v819
        %v1169 = vunpack.c.h.b16 %v819
        %v1170 = vunpack.c.l.b16 %v820
        %v1171 = vunpack.c.h.b16 %v820
        %v1172 = vunpack.c.l.b16 %v821
        %v1173 = vunpack.c.h.b16 %v821
        %v1174 = vunpack.c.l.b16 %v822
        %v1175 = vunpack.c.h.b16 %v822
        %v1176 = vunpack.c.l.b16 %v823
        %v1177 = vunpack.c.h.b16 %v823
        %v1178 = vunpack.c.l.b16 %v824
        %v1179 = vunpack.c.h.b16 %v824
        %v1180 = vunpack.c.l.b16 %v825
        %v1181 = vunpack.c.h.b16 %v825
        %v1182 = vunpack.c.l.b16 %v826
        %v1183 = vunpack.c.h.b16 %v826
        %v1184 = vunpack.c.l.b16 %v827
        %v1185 = vunpack.c.h.b16 %v827
        %v1186 = vunpack.c.l.b16 %v828
        %v1187 = vunpack.c.h.b16 %v828
        %v1188 = vunpack.c.l.b16 %v829
        %v1189 = vunpack.c.h.b16 %v829
        %v1190 = vunpack.c.l.b16 %v830
        %v1191 = vunpack.c.h.b16 %v830
        %v1192 = vunpack.c.l.b16 %v831
        %v1193 = vunpack.c.h.b16 %v831
        %v1194 = vunpack.c.l.b16 %v832
        %v1195 = vunpack.c.h.b16 %v832
        %v1196 = vunpack.c.l.b16 %v833
        %v1197 = vunpack.c.h.b16 %v833
        %v1198 = vunpack.c.l.b16 %v834
        %v1199 = vunpack.c.h.b16 %v834
        %v1200 = vunpack.c.l.b16 %v835
        %v1201 = vunpack.c.h.b16 %v835
        %v1202 = vunpack.c.l.b16 %v836
        %v1203 = vunpack.c.h.b16 %v836
        %v1204 = vunpack.c.l.b16 %v837
        %v1205 = vunpack.c.h.b16 %v837
        %v1206 = vunpack.c.l.b16 %v838
        %v1207 = vunpack.c.h.b16 %v838
        %v1208 = vunpack.c.l.b16 %v839
        %v1209 = vunpack.c.h.b16 %v839
        %v1210 = vunpack.c.l.b16 %v840
        %v1211 = vunpack.c.h.b16 %v840
        %v1212 = vunpack.c.l.b16 %v841
        %v1213 = vunpack.c.h.b16 %v841
        %v1214 = vunpack.c.l.b16 %v842
        %v1215 = vunpack.c.h.b16 %v842
        %v1216 = vunpack.c.l.b16 %v843
        %v1217 = vunpack.c.h.b16 %v843
        %v1218 = vunpack.c.l.b16 %v844
        %v1219 = vunpack.c.h.b16 %v844
        %v1220 = vunpack.c.l.b16 %v845
        %v1221 = vunpack.c.h.b16 %v845
        %v1222 = vunpack.c.l.b16 %v846
        %v1223 = vunpack.c.h.b16 %v846
        %v1224 = vunpack.c.l.b16 %v847
        %v1225 = vunpack.c.h.b16 %v847
        %v1226 = vunpack.c.l.b16 %v848
        %v1227 = vunpack.c.h.b16 %v848
        %v1228 = vunpack.c.l.b16 %v849
        %v1229 = vunpack.c.h.b16 %v849
        %v1230 = vunpack.c.l.b16 %v850
        %v1231 = vunpack.c.h.b16 %v850
        %v1232 = vunpack.c.l.b16 %v851
        %v1233 = vunpack.c.h.b16 %v851
        %v1234 = vunpack.c.l.b16 %v852
        %v1235 = vunpack.c.h.b16 %v852
        %v1236 = vunpack.c.l.b16 %v853
        %v1237 = vunpack.c.h.b16 %v853
        %v1238 = vunpack.c.l.b16 %v854
        %v1239 = vunpack.c.h.b16 %v854
        %v1240 = vunpack.c.l.b16 %v855
        %v1241 = vunpack.c.h.b16 %v855
        %v1242 = vunpack.c.l.b16 %v856
        %v1243 = vunpack.c.h.b16 %v856
        %v1244 = vunpack.c.l.b16 %v857
        %v1245 = vunpack.c.h.b16 %v857
        %v1246 = vunpack.c.l.b16 %v858
        %v1247 = vunpack.c.h.b16 %v858
        %v1248 = vunpack.c.l.b16 %v859
        %v1249 = vunpack.c.h.b16 %v859
        %v1250 = vunpack.c.l.b16 %v860
        %v1251 = vunpack.c.h.b16 %v860
        %v1252 = vunpack.c.l.b16 %v861
        %v1253 = vunpack.c.h.b16 %v861
        %v1254 = vunpack.c.l.b16 %v862
        %v1255 = vunpack.c.h.b16 %v862
        %v1256 = vunpack.c.l.b16 %v863
        %v1257 = vunpack.c.h.b16 %v863
        %v1258 = vpack.c.b16 %v1006, %v1002
        %v1259 = vpack.c.b16 %v1007, %v1003
        %v1260 = vpack.c.b16 %v1008, %v1004
        %v1261 = vpack.c.b16 %v1009, %v1005
        %v1262 = vpack.c.b16 %v1014, %v1010
        %v1263 = vpack.c.b16 %v1015, %v1011
        %v1264 = vpack.c.b16 %v1016, %v1012
        %v1265 = vpack.c.b16 %v1017, %v1013
        %v1266 = vpack.c.b16 %v1022, %v1018
        %v1267 = vpack.c.b16 %v1023, %v1019
        %v1268 = vpack.c.b16 %v1024, %v1020
        %v1269 = vpack.c.b16 %v1025, %v1021
        %v1270 = vpack.c.b16 %v1030, %v1026
        %v1271 = vpack.c.b16 %v1031, %v1027
        %v1272 = vpack.c.b16 %v1032, %v1028
        %v1273 = vpack.c.b16 %v1033, %v1029
        %v1274 = vpack.c.b16 %v1038, %v1034
        %v1275 = vpack.c.b16 %v1039, %v1035
        %v1276 = vpack.c.b16 %v1040, %v1036
        %v1277 = vpack.c.b16 %v1041, %v1037
        %v1278 = vpack.c.b16 %v1046, %v1042
        %v1279 = vpack.c.b16 %v1047, %v1043
        %v1280 = vpack.c.b16 %v1048, %v1044
        %v1281 = vpack.c.b16 %v1049, %v1045
        %v1282 = vpack.c.b16 %v1054, %v1050
        %v1283 = vpack.c.b16 %v1055, %v1051
        %v1284 = vpack.c.b16 %v1056, %v1052
        %v1285 = vpack.c.b16 %v1057, %v1053
        %v1286 = vpack.c.b16 %v1062, %v1058
        %v1287 = vpack.c.b16 %v1063, %v1059
        %v1288 = vpack.c.b16 %v1064, %v1060
        %v1289 = vpack.c.b16 %v1065, %v1061
        %v1290 = vpack.c.b16 %v1070, %v1066
        %v1291 = vpack.c.b16 %v1071, %v1067
        %v1292 = vpack.c.b16 %v1072, %v1068
        %v1293 = vpack.c.b16 %v1073, %v1069
        %v1294 = vpack.c.b16 %v1078, %v1074
        %v1295 = vpack.c.b16 %v1079, %v1075
        %v1296 = vpack.c.b16 %v1080, %v1076
        %v1297 = vpack.c.b16 %v1081, %v1077
        %v1298 = vpack.c.b16 %v1086, %v1082
        %v1299 = vpack.c.b16 %v1087, %v1083
        %v1300 = vpack.c.b16 %v1088, %v1084
        %v1301 = vpack.c.b16 %v1089, %v1085
        %v1302 = vpack.c.b16 %v1094, %v1090
        %v1303 = vpack.c.b16 %v1095, %v1091
        %v1304 = vpack.c.b16 %v1096, %v1092
        %v1305 = vpack.c.b16 %v1097, %v1093
        %v1306 = vpack.c.b16 %v1102, %v1098
        %v1307 = vpack.c.b16 %v1103, %v1099
        %v1308 = vpack.c.b16 %v1104, %v1100
        %v1309 = vpack.c.b16 %v1105, %v1101
        %v1310 = vpack.c.b16 %v1110, %v1106
        %v1311 = vpack.c.b16 %v1111, %v1107
        %v1312 = vpack.c.b16 %v1112, %v1108
        %v1313 = vpack.c.b16 %v1113, %v1109
        %v1314 = vpack.c.b16 %v1118, %v1114
        %v1315 = vpack.c.b16 %v1119, %v1115
        %v1316 = vpack.c.b16 %v1120, %v1116
        %v1317 = vpack.c.b16 %v1121, %v1117
        %v1318 = vpack.c.b16 %v1126, %v1122
        %v1319 = vpack.c.b16 %v1127, %v1123
        %v1320 = vpack.c.b16 %v1128, %v1124
        %v1321 = vpack.c.b16 %v1129, %v1125
        %v1322 = vpack.c.b16 %v1134, %v1130
        %v1323 = vpack.c.b16 %v1135, %v1131
        %v1324 = vpack.c.b16 %v1136, %v1132
        %v1325 = vpack.c.b16 %v1137, %v1133
        %v1326 = vpack.c.b16 %v1142, %v1138
        %v1327 = vpack.c.b16 %v1143, %v1139
        %v1328 = vpack.c.b16 %v1144, %v1140
        %v1329 = vpack.c.b16 %v1145, %v1141
        %v1330 = vpack.c.b16 %v1150, %v1146
        %v1331 = vpack.c.b16 %v1151, %v1147
        %v1332 = vpack.c.b16 %v1152, %v1148
        %v1333 = vpack.c.b16 %v1153, %v1149
        %v1334 = vpack.c.b16 %v1158, %v1154
        %v1335 = vpack.c.b16 %v1159, %v1155
        %v1336 = vpack.c.b16 %v1160, %v1156
        %v1337 = vpack.c.b16 %v1161, %v1157
        %v1338 = vpack.c.b16 %v1166, %v1162
        %v1339 = vpack.c.b16 %v1167, %v1163
        %v1340 = vpack.c.b16 %v1168, %v1164
        %v1341 = vpack.c.b16 %v1169, %v1165
        %v1342 = vpack.c.b16 %v1174, %v1170
        %v1343 = vpack.c.b16 %v1175, %v1171
        %v1344 = vpack.c.b16 %v1176, %v1172
        %v1345 = vpack.c.b16 %v1177, %v1173
        %v1346 = vpack.c.b16 %v1182, %v1178
        %v1347 = vpack.c.b16 %v1183, %v1179
        %v1348 = vpack.c.b16 %v1184, %v1180
        %v1349 = vpack.c.b16 %v1185, %v1181
        %v1350 = vpack.c.b16 %v1190, %v1186
        %v1351 = vpack.c.b16 %v1191, %v1187
        %v1352 = vpack.c.b16 %v1192, %v1188
        %v1353 = vpack.c.b16 %v1193, %v1189
        %v1354 = vpack.c.b16 %v1198, %v1194
        %v1355 = vpack.c.b16 %v1199, %v1195
        %v1356 = vpack.c.b16 %v1200, %v1196
        %v1357 = vpack.c.b16 %v1201, %v1197
        %v1358 = vpack.c.b16 %v1206, %v1202
        %v1359 = vpack.c.b16 %v1207, %v1203
        %v1360 = vpack.c.b16 %v1208, %v1204
        %v1361 = vpack.c.b16 %v1209, %v1205
        %v1362 = vpack.c.b16 %v1214, %v1210
        %v1363 = vpack.c.b16 %v1215, %v1211
        %v1364 = vpack.c.b16 %v1216, %v1212
        %v1365 = vpack.c.b16 %v1217, %v1213
        %v1366 = vpack.c.b16 %v1222, %v1218
        %v1367 = vpack.c.b16 %v1223, %v1219
        %v1368 = vpack.c.b16 %v1224, %v1220
        %v1369 = vpack.c.b16 %v1225, %v1221
        %v1370 = vpack.c.b16 %v1230, %v1226
        %v1371 = vpack.c.b16 %v1231, %v1227
        %v1372 = vpack.c.b16 %v1232, %v1228
        %v1373 = vpack.c.b16 %v1233, %v1229
        %v1374 = vpack.c.b16 %v1238, %v1234
        %v1375 = vpack.c.b16 %v1239, %v1235
        %v1376 = vpack.c.b16 %v1240, %v1236
        %v1377 = vpack.c.b16 %v1241, %v1237
        %v1378 = vpack.c.b16 %v1246, %v1242
        %v1379 = vpack.c.b16 %v1247, %v1243
        %v1380 = vpack.c.b16 %v1248, %v1244
        %v1381 = vpack.c.b16 %v1249, %v1245
        %v1382 = vpack.c.b16 %v1254, %v1250
        %v1383 = vpack.c.b16 %v1255, %v1251
        %v1384 = vpack.c.b16 %v1256, %v1252
        %v1385 = vpack.c.b16 %v1257, %v1253
        %1514 = vmatpush.bf16.msra.mxu0 %v1286
        %1515 = vmatpush.bf16.msra.mxu0 %v1282
        %1516 = vmatpush.bf16.msra.mxu0 %v1278
        %1517 = vmatpush.bf16.msra.mxu0 %v1274
        %1518 = vmatpush.bf16.msra.mxu0 %v1270
        %1519 = vmatpush.bf16.msra.mxu0 %v1266
        %1520 = vmatpush.bf16.msra.mxu0 %v1262
        %1521 = vmatpush.bf16.msra.mxu0 %v1258
        %1522 = vmatmul.bf16.gmra.mxu0 %v732
        %v1523 = vpop.f32.mrf.mxu0
        %v1524 = vadd.f32 %v866, %v1523
        %v1525 = vpop.f32.mrf.mxu0
        %v1526 = vadd.f32 %v866, %v1525
        %1527 = vdwg.mxu0
        %1528 = vmatpush.bf16.msra.mxu0 %v1318
        %1529 = vmatpush.bf16.msra.mxu0 %v1314
        %1530 = vmatpush.bf16.msra.mxu0 %v1310
        %1531 = vmatpush.bf16.msra.mxu0 %v1306
        %1532 = vmatpush.bf16.msra.mxu0 %v1302
        %1533 = vmatpush.bf16.msra.mxu0 %v1298
        %1534 = vmatpush.bf16.msra.mxu0 %v1294
        %1535 = vmatpush.bf16.msra.mxu0 %v1290
        %1536 = vmatmul.bf16.gmra.mxu0 %v733
        %v1537 = vpop.f32.mrf.mxu0
        %v1538 = vadd.f32 %v1524, %v1537
        %v1539 = vpop.f32.mrf.mxu0
        %v1540 = vadd.f32 %v1526, %v1539
        %1541 = vdwg.mxu0
        %1542 = vmatpush.bf16.msra.mxu0 %v1350
        %1543 = vmatpush.bf16.msra.mxu0 %v1346
        %1544 = vmatpush.bf16.msra.mxu0 %v1342
        %1545 = vmatpush.bf16.msra.mxu0 %v1338
        %1546 = vmatpush.bf16.msra.mxu0 %v1334
        %1547 = vmatpush.bf16.msra.mxu0 %v1330
        %1548 = vmatpush.bf16.msra.mxu0 %v1326
        %1549 = vmatpush.bf16.msra.mxu0 %v1322
        %1550 = vmatmul.bf16.gmra.mxu0 %v734
        %v1551 = vpop.f32.mrf.mxu0
        %v1552 = vadd.f32 %v1538, %v1551
        %v1553 = vpop.f32.mrf.mxu0
        %v1554 = vadd.f32 %v1540, %v1553
        %1555 = vdwg.mxu0
        %1556 = vmatpush.bf16.msra.mxu0 %v1382
        %1557 = vmatpush.bf16.msra.mxu0 %v1378
        %1558 = vmatpush.bf16.msra.mxu0 %v1374
        %1559 = vmatpush.bf16.msra.mxu0 %v1370
        %1560 = vmatpush.bf16.msra.mxu0 %v1366
        %1561 = vmatpush.bf16.msra.mxu0 %v1362
        %1562 = vmatpush.bf16.msra.mxu0 %v1358
        %1563 = vmatpush.bf16.msra.mxu0 %v1354
        %1564 = vmatmul.bf16.gmra.mxu0 %v735
        %v1565 = vpop.f32.mrf.mxu0
        %v1566 = vadd.f32 %v1552, %v1565
        %v1567 = vpop.f32.mrf.mxu0
        %v1568 = vadd.f32 %v1554, %v1567
        %1569 = vdwg.mxu0
        %1570 = vmatpush.bf16.msra.mxu0 %v1287
        %1571 = vmatpush.bf16.msra.mxu0 %v1283
        %1572 = vmatpush.bf16.msra.mxu0 %v1279
        %1573 = vmatpush.bf16.msra.mxu0 %v1275
        %1574 = vmatpush.bf16.msra.mxu0 %v1271
        %1575 = vmatpush.bf16.msra.mxu0 %v1267
        %1576 = vmatpush.bf16.msra.mxu0 %v1263
        %1577 = vmatpush.bf16.msra.mxu0 %v1259
        %1578 = vmatmul.bf16.gmra.mxu0 %v732
        %v1579 = vpop.f32.mrf.mxu0
        %v1580 = vadd.f32 %v867, %v1579
        %v1581 = vpop.f32.mrf.mxu0
        %v1582 = vadd.f32 %v867, %v1581
        %1583 = vdwg.mxu0
        %1584 = vmatpush.bf16.msra.mxu0 %v1319
        %1585 = vmatpush.bf16.msra.mxu0 %v1315
        %1586 = vmatpush.bf16.msra.mxu0 %v1311
        %1587 = vmatpush.bf16.msra.mxu0 %v1307
        %1588 = vmatpush.bf16.msra.mxu0 %v1303
        %1589 = vmatpush.bf16.msra.mxu0 %v1299
        %1590 = vmatpush.bf16.msra.mxu0 %v1295
        %1591 = vmatpush.bf16.msra.mxu0 %v1291
        %1592 = vmatmul.bf16.gmra.mxu0 %v733
        %v1593 = vpop.f32.mrf.mxu0
        %v1594 = vadd.f32 %v1580, %v1593
        %v1595 = vpop.f32.mrf.mxu0
        %v1596 = vadd.f32 %v1582, %v1595
        %1597 = vdwg.mxu0
        %1598 = vmatpush.bf16.msra.mxu0 %v1351
        %1599 = vmatpush.bf16.msra.mxu0 %v1347
        %1600 = vmatpush.bf16.msra.mxu0 %v1343
        %1601 = vmatpush.bf16.msra.mxu0 %v1339
        %1602 = vmatpush.bf16.msra.mxu0 %v1335
        %1603 = vmatpush.bf16.msra.mxu0 %v1331
        %1604 = vmatpush.bf16.msra.mxu0 %v1327
        %1605 = vmatpush.bf16.msra.mxu0 %v1323
        %1606 = vmatmul.bf16.gmra.mxu0 %v734
        %v1607 = vpop.f32.mrf.mxu0
        %v1608 = vadd.f32 %v1594, %v1607
        %v1609 = vpop.f32.mrf.mxu0
        %v1610 = vadd.f32 %v1596, %v1609
        %1611 = vdwg.mxu0
        %1612 = vmatpush.bf16.msra.mxu0 %v1383
        %1613 = vmatpush.bf16.msra.mxu0 %v1379
        %1614 = vmatpush.bf16.msra.mxu0 %v1375
        %1615 = vmatpush.bf16.msra.mxu0 %v1371
        %1616 = vmatpush.bf16.msra.mxu0 %v1367
        %1617 = vmatpush.bf16.msra.mxu0 %v1363
        %1618 = vmatpush.bf16.msra.mxu0 %v1359
        %1619 = vmatpush.bf16.msra.mxu0 %v1355
        %1620 = vmatmul.bf16.gmra.mxu0 %v735
        %v1621 = vpop.f32.mrf.mxu0
        %v1622 = vadd.f32 %v1608, %v1621
        %v1623 = vpop.f32.mrf.mxu0
        %v1624 = vadd.f32 %v1610, %v1623
        %1625 = vdwg.mxu0
        %1626 = vmatpush.bf16.msra.mxu0 %v1288
        %1627 = vmatpush.bf16.msra.mxu0 %v1284
        %1628 = vmatpush.bf16.msra.mxu0 %v1280
        %1629 = vmatpush.bf16.msra.mxu0 %v1276
        %1630 = vmatpush.bf16.msra.mxu0 %v1272
        %1631 = vmatpush.bf16.msra.mxu0 %v1268
        %1632 = vmatpush.bf16.msra.mxu0 %v1264
        %1633 = vmatpush.bf16.msra.mxu0 %v1260
        %1634 = vmatmul.bf16.gmra.mxu0 %v732
        %v1635 = vpop.f32.mrf.mxu0
        %v1636 = vadd.f32 %v868, %v1635
        %v1637 = vpop.f32.mrf.mxu0
        %v1638 = vadd.f32 %v868, %v1637
        %1639 = vdwg.mxu0
        %1640 = vmatpush.bf16.msra.mxu0 %v1320
        %1641 = vmatpush.bf16.msra.mxu0 %v1316
        %1642 = vmatpush.bf16.msra.mxu0 %v1312
        %1643 = vmatpush.bf16.msra.mxu0 %v1308
        %1644 = vmatpush.bf16.msra.mxu0 %v1304
        %1645 = vmatpush.bf16.msra.mxu0 %v1300
        %1646 = vmatpush.bf16.msra.mxu0 %v1296
        %1647 = vmatpush.bf16.msra.mxu0 %v1292
        %1648 = vmatmul.bf16.gmra.mxu0 %v733
        %v1649 = vpop.f32.mrf.mxu0
        %v1650 = vadd.f32 %v1636, %v1649
        %v1651 = vpop.f32.mrf.mxu0
        %v1652 = vadd.f32 %v1638, %v1651
        %1653 = vdwg.mxu0
        %1654 = vmatpush.bf16.msra.mxu0 %v1352
        %1655 = vmatpush.bf16.msra.mxu0 %v1348
        %1656 = vmatpush.bf16.msra.mxu0 %v1344
        %1657 = vmatpush.bf16.msra.mxu0 %v1340
        %1658 = vmatpush.bf16.msra.mxu0 %v1336
        %1659 = vmatpush.bf16.msra.mxu0 %v1332
        %1660 = vmatpush.bf16.msra.mxu0 %v1328
        %1661 = vmatpush.bf16.msra.mxu0 %v1324
        %1662 = vmatmul.bf16.gmra.mxu0 %v734
        %v1663 = vpop.f32.mrf.mxu0
        %v1664 = vadd.f32 %v1650, %v1663
        %v1665 = vpop.f32.mrf.mxu0
        %v1666 = vadd.f32 %v1652, %v1665
        %1667 = vdwg.mxu0
        %1668 = vmatpush.bf16.msra.mxu0 %v1384
        %1669 = vmatpush.bf16.msra.mxu0 %v1380
        %1670 = vmatpush.bf16.msra.mxu0 %v1376
        %1671 = vmatpush.bf16.msra.mxu0 %v1372
        %1672 = vmatpush.bf16.msra.mxu0 %v1368
        %1673 = vmatpush.bf16.msra.mxu0 %v1364
        %1674 = vmatpush.bf16.msra.mxu0 %v1360
        %1675 = vmatpush.bf16.msra.mxu0 %v1356
        %1676 = vmatmul.bf16.gmra.mxu0 %v735
        %v1677 = vpop.f32.mrf.mxu0
        %v1678 = vadd.f32 %v1664, %v1677
        %v1679 = vpop.f32.mrf.mxu0
        %v1680 = vadd.f32 %v1666, %v1679
        %1681 = vdwg.mxu0
        %1682 = vmatpush.bf16.msra.mxu0 %v1289
        %1683 = vmatpush.bf16.msra.mxu0 %v1285
        %1684 = vmatpush.bf16.msra.mxu0 %v1281
        %1685 = vmatpush.bf16.msra.mxu0 %v1277
        %1686 = vmatpush.bf16.msra.mxu0 %v1273
        %1687 = vmatpush.bf16.msra.mxu0 %v1269
        %1688 = vmatpush.bf16.msra.mxu0 %v1265
        %1689 = vmatpush.bf16.msra.mxu0 %v1261
        %1690 = vmatmul.bf16.gmra.mxu0 %v732
        %v1691 = vpop.f32.mrf.mxu0
        %v1692 = vadd.f32 %v869, %v1691
        %v1693 = vpop.f32.mrf.mxu0
        %v1694 = vadd.f32 %v869, %v1693
        %1695 = vdwg.mxu0
        %1696 = vmatpush.bf16.msra.mxu0 %v1321
        %1697 = vmatpush.bf16.msra.mxu0 %v1317
        %1698 = vmatpush.bf16.msra.mxu0 %v1313
        %1699 = vmatpush.bf16.msra.mxu0 %v1309
        %1700 = vmatpush.bf16.msra.mxu0 %v1305
        %1701 = vmatpush.bf16.msra.mxu0 %v1301
        %1702 = vmatpush.bf16.msra.mxu0 %v1297
        %1703 = vmatpush.bf16.msra.mxu0 %v1293
        %1704 = vmatmul.bf16.gmra.mxu0 %v733
        %v1705 = vpop.f32.mrf.mxu0
        %v1706 = vadd.f32 %v1692, %v1705
        %v1707 = vpop.f32.mrf.mxu0
        %v1708 = vadd.f32 %v1694, %v1707
        %1709 = vdwg.mxu0
        %1710 = vmatpush.bf16.msra.mxu0 %v1353
        %1711 = vmatpush.bf16.msra.mxu0 %v1349
        %1712 = vmatpush.bf16.msra.mxu0 %v1345
        %1713 = vmatpush.bf16.msra.mxu0 %v1341
        %1714 = vmatpush.bf16.msra.mxu0 %v1337
        %1715 = vmatpush.bf16.msra.mxu0 %v1333
        %1716 = vmatpush.bf16.msra.mxu0 %v1329
        %1717 = vmatpush.bf16.msra.mxu0 %v1325
        %1718 = vmatmul.bf16.gmra.mxu0 %v734
        %v1719 = vpop.f32.mrf.mxu0
        %v1720 = vadd.f32 %v1706, %v1719
        %v1721 = vpop.f32.mrf.mxu0
        %v1722 = vadd.f32 %v1708, %v1721
        %1723 = vdwg.mxu0
        %1724 = vmatpush.bf16.msra.mxu0 %v1385
        %1725 = vmatpush.bf16.msra.mxu0 %v1381
        %1726 = vmatpush.bf16.msra.mxu0 %v1377
        %1727 = vmatpush.bf16.msra.mxu0 %v1373
        %1728 = vmatpush.bf16.msra.mxu0 %v1369
        %1729 = vmatpush.bf16.msra.mxu0 %v1365
        %1730 = vmatpush.bf16.msra.mxu0 %v1361
        %1731 = vmatpush.bf16.msra.mxu0 %v1357
        %1732 = vmatmul.bf16.gmra.mxu0 %v735
        %v1733 = vpop.f32.mrf.mxu0
        %v1734 = vadd.f32 %v1720, %v1733
        %v1735 = vpop.f32.mrf.mxu0
        %v1736 = vadd.f32 %v1722, %v1735
        %1737 = vdwg.mxu0
        %v1738 = vmul.f32 %v1566, %v1566
        %v1739 = vmul.f32 %v1622, %v1622
        %v1740 = vmul.f32 %v1678, %v1678
        %v1741 = vmul.f32 %v1734, %v1734
        %v1742 = vmul.f32 %v1568, %v1568
        %v1743 = vmul.f32 %v1624, %v1624
        %v1744 = vmul.f32 %v1680, %v1680
        %v1745 = vmul.f32 %v1736, %v1736
        %v1746 = vadd.f32 %v1738, %v1739
        %v1747 = vadd.f32 %v1746, %v1740
        %v1748 = vadd.f32 %v1747, %v1741
        %1749 = vadd.xlane.f32.xlu0 %v1748
        %v1750 = vpop.xlane.xlu0 %1749
        %v1751 = vadd.f32 %v1742, %v1743
        %v1752 = vadd.f32 %v1751, %v1744
        %v1753 = vadd.f32 %v1752, %v1745
        %1754 = vadd.xlane.f32.xlu0 %v1753
        %v1755 = vpop.xlane.xlu0 %1754
        %v1756 = vmax.f32 %v1750, 1e-24
        %v1757 = vmax.f32 %v1755, 1e-24
        %v1758 = vrsqrt.pop %v1756
        %v1759 = vmul.f32 %v1758, %v1756
        %v1760 = vmul.f32 %v1759, %v1758
        %v1761 = vmul.f32 0.5, %v1760
        %v1762 = vsub.f32 1.5, %v1761
        %v1763 = vmul.f32 %v1758, %v1762
        %vm1764 = vweird.f32 %v1756
        %vm1765 = vweird.f32 %v1758
        %vm1766 = vmor %vm1764, %vm1765
        %v1767 = vsel %vm1766, %v1758, %v1763
        %v1768 = vrsqrt.pop %v1757
        %v1769 = vmul.f32 %v1768, %v1757
        %v1770 = vmul.f32 %v1769, %v1768
        %v1771 = vmul.f32 0.5, %v1770
        %v1772 = vsub.f32 1.5, %v1771
        %v1773 = vmul.f32 %v1768, %v1772
        %vm1774 = vweird.f32 %v1757
        %vm1775 = vweird.f32 %v1768
        %vm1776 = vmor %vm1774, %vm1775
        %v1777 = vsel %vm1776, %v1768, %v1773
        %v1778 = vmul.f32 %v1566, %v1767
        %v1779 = vmul.f32 %v1622, %v1767
        %v1780 = vmul.f32 %v1678, %v1767
        %v1781 = vmul.f32 %v1734, %v1767
        %v1782 = vmul.f32 %v1568, %v1777
        %v1783 = vmul.f32 %v1624, %v1777
        %v1784 = vmul.f32 %v1680, %v1777
        %v1785 = vmul.f32 %v1736, %v1777
        %1786 = vst [vmem:[%s360] sm:$0xff] %v1778
        %1787 = vst [vmem:[%s360 + $0x8] sm:$0xff] %v1779
        %1788 = vst [vmem:[%s360 + $0x10] sm:$0xff] %v1780
        %1789 = vst [vmem:[%s360 + $0x18] sm:$0xff] %v1781
        %1790 = vst [vmem:[%s360 + $0x20] sm:$0xff] %v1782
        %1791 = vst [vmem:[%s360 + $0x28] sm:$0xff] %v1783
        %1792 = vst [vmem:[%s360 + $0x30] sm:$0xff] %v1784
        %1793 = vst [vmem:[%s360 + $0x38] sm:$0xff] %v1785
        %s1794 = sand.u32 %s227, 1
        %s1795 = scalar_lea.sflag [#allocation4], %s1794
        %s1796 = sand.u32 %s227, 1
        %s1797 = smul.addr %s1796, 64
        %s1798 = scalar_lea.vmem [#allocation7], %s1797
        // Predicated region
        $region65: #{tpu_custom_call.1} parent=55 // pred_check
          %p1799 = pneg %p237
        $region66: #{tpu_custom_call.1} parent=55 // pred_check_branch
          %1801 = sbr.rel (%p1799) target = $region68
        $region67: #{tpu_custom_call.1} parent=55 // pred_region
          %s1802 = smul.u32 2, %s25
          %1804 = vsyncadd %s1795, 0
          %s1805 = smul.addr %s1802, 4
          %s1806 = smul.addr %s1805, 8
          %s1807 = scalar_lea.hbm %s9, %s1806
          %s1808 = sshll.u32 %s1798, 4
          %s1809 = int_to_ptr.vmem [resolvable:$true] %s1808
          %s1810 = sshll.u32 %s1807, 4
          %s1811 = int_to_ptr.hbm [resolvable:$true] %s1810
          %1816 = dma.vmem_to_hbm [thread:$0]  %s1809, 1024, %s1811, %s1795, 512, 512, 32
        $region68: #{tpu_custom_call.1} parent=55 // pred_fallthru
          _
      $region56: #{tpu_custom_call.1} parent=5 // pred_fallthru
        _
      %p1817 = scmp.le.s32.totalorder 2, %s20
      // Predicated region
      $region69: #{tpu_custom_call.1} parent=5 // pred_check
        %p1818 = pneg %p1817
      $region70: #{tpu_custom_call.1} parent=5 // pred_check_branch
        %1820 = sbr.rel (%p1818) target = $region72
      $region71: #{tpu_custom_call.1} parent=5 // pred_region
        %s1821 = ssub.s32 %s20, 2
        // Predicated region
        $region73: #{tpu_custom_call.1} parent=71 // pred_check
          %p1822 = pneg %p243
        $region74: #{tpu_custom_call.1} parent=71 // pred_check_branch
          %1824 = sbr.rel (%p1822) target = $region76
        $region75: #{tpu_custom_call.1} parent=71 // pred_region
          %s1825 = sand.u32 %s228, 1
          %s1826 = scalar_lea.sflag [#allocation4], %s1825
          %s1827 = sand.u32 %s228, 1
          %s1828 = smul.addr %s1827, 64
          %s1829 = scalar_lea.vmem [#allocation7], %s1828
          %1831 = dma.done %s1826, 1024
        $region76: #{tpu_custom_call.1} parent=71 // pred_fallthru
          _
      $region72: #{tpu_custom_call.1} parent=5 // pred_fallthru
        _
    $region6: #{tpu_custom_call.1} parent=1 // loop_footer
      %s24 = sadd.s32 1, %s20
    $region7: #{tpu_custom_call.1} parent=1 // loop_footer_branch
      %19 = sbr.rel target = $region3
    $region8: #{tpu_custom_call.1} parent=1 // loop_exit
      _
    %1832 = vsyncpa [#allocation3], 1
    %s1833 = scalar_lea.sflag [#allocation3], 1
    %1834 = vsyncpa %s1833, 1
    %1835 = vsyncpa [#allocation6], 1
    %1836 = vsyncpa [#allocation4], 1
    %s1837 = scalar_lea.sflag [#allocation4], 1
    %1838 = vsyncpa %s1837, 1

</llo_original>
